<compile_context>
chip_gen: v7x
topology: tpu7x:2x2x1
jax: 0.10.0
libtpu: 0.0.40
codegen_flags: <defaults>
</compile_context>

<pallas_src>
import functools
import numpy as np
import jax
import jax.numpy as jnp
from jax.experimental import pallas as pl
from jax.experimental.pallas import tpu as pltpu

LANES = 128  # vreg lane width; channel / tap axes are zero-padded to this


def _round_up(x, m):
    return ((x + m - 1) // m) * m


def _const_index_map(ndim, *_grid_idx):
    return (0,) * ndim


def _const_spec(shape):
    """BlockSpec for a constant (same block every grid step): single-buffered."""
    imap = functools.partial(_const_index_map, len(shape))
    if hasattr(pl, "Buffered"):
        try:
            return pl.BlockSpec(shape, imap, pipeline_mode=pl.Buffered(1))
        except Exception:   # older signature: fall back to default double buffering
            pass
    return pl.BlockSpec(shape, imap)


# --------------------------- static planning --------------------------------

def _plan(x_shape, params, strides, paddings):
    """Per-layer geometry (Python ints only). Pitches are multiples of 8 so all
    kh*igw / per-image row offsets are sublane-aligned."""
    N, C, H, W = map(int, x_shape)
    n_layers = len(params)
    if isinstance(paddings, int):
        paddings = (paddings,) * n_layers
    assert len(strides) == n_layers and len(paddings) == n_layers

    cfgs = []
    cin = C
    hp = wp = igw = None
    for li, (wt, _) in enumerate(params):
        cout, cin_w, kh, kw = map(int, wt.shape)
        assert cin_w == cin, "channel mismatch"
        assert kh == kw, "only square kernels (module passes int kernel_sizes)"
        assert cout <= LANES and cin <= LANES, \
            "TODO(synk): tile the lane axis for channels > 128"
        k, s, p = kh, int(strides[li]), int(paddings[li])
        if li == 0:
            hp, wp = H + 2 * p, W + 2 * p
            igw = _round_up(wp, 8)          # 8-aligned grid pitch
        else:
            assert p == 0, "TODO(synk): zero padding on hidden conv layers"
        oh, ow = (hp - k) // s + 1, (wp - k) // s + 1
        assert oh >= 1 and ow >= 1
        last = li == n_layers - 1
        compact = (s > 1) or last           # stride subsample / final row compaction
        tpg = max(1, LANES // cin)          # taps per fused-K matmul group
        taps = [(kw_, kh_) for kw_ in range(k) for kh_ in range(k)]
        cfgs.append(dict(k=k, s=s, cin=cin, cout=cout, igw=igw, hp=hp, wp=wp,
                         oh=oh, ow=ow, last=last, compact=compact,
                         taps_per_group=tpg,
                         groups=[taps[i:i + tpg] for i in range(0, k * k, tpg)]))
        if compact:                          # output compacted onto a fresh (oh, ow) grid
            igw = ow if last else _round_up(ow, 8)
        hp, wp, cin = oh, ow, cout

    assert cfgs[-1]["compact"]

    # Backward pass: rows each layer must produce so the next layer's shifted reads
    # stay in bounds; conv_rows trimmed to the last needed window start.
    need_next = 0
    for cfg in reversed(cfgs):
        k, s, igw, oh, ow = cfg["k"], cfg["s"], cfg["igw"], cfg["oh"], cfg["ow"]
        cfg["tail"] = (k - 1) * igw + (k - 1)
        if cfg["compact"]:
            cfg["out_pitch"] = ow if cfg["last"] else _round_up(ow, 8)
            natural = oh * cfg["out_pitch"]
            cfg["out_rows"] = _round_up(max(natural, need_next), 8)
            cfg["conv_rows"] = _round_up((oh - 1) * s * igw + (ow - 1) * s + 1, 8)
        else:
            cfg["out_pitch"] = igw
            cfg["out_rows"] = _round_up(max(need_next, 8), 8)
            cfg["conv_rows"] = cfg["out_rows"]
        need_next = cfg["conv_rows"] + cfg["tail"]
    in_rows = _round_up(need_next, 8)
    return cfgs, in_rows


def _choose_b_tile(n, cfgs, in_rows, cin0):
    """Images per grid step: amortize per-step overhead, keep >=2 grid steps when
    possible (v7x megacore), cap by a VMEM budget sized for v7x (64 MiB/TC)."""
    per_img = in_rows * cin0 * 4
    for cfg in cfgs:
        kk_cin = cfg["k"] * cfg["k"] * cfg["cin"]
        per_img += cfg["conv_rows"] * (kk_cin + LANES) * 4   # im2col LHS + conv output
        per_img += cfg["out_rows"] * LANES * 4
    budget = 24 * 1024 * 1024
    cap = max(1, budget // max(per_img, 1))
    return int(min(8, max(1, n // 2), cap))


def _stack_plan(cfgs, in_rows, b_tile):
    """Add batch-stacking numbers: per-image pitch, stacked conv M, kw-slice span."""
    P = A = in_rows                 # pitch / rows present for the last image
    for cfg in cfgs:
        cfg["p_in"], cfg["a_in"] = P, A
        if cfg["compact"]:
            cfg["m_rows"] = cfg["conv_rows"]                       # per-image conv M
            cfg["span"] = (b_tile - 1) * P + cfg["conv_rows"] + (cfg["k"] - 1) * cfg["igw"]
            P = A = cfg["out_rows"]
        else:
            cfg["m_rows"] = (b_tile - 1) * P + cfg["conv_rows"]    # stacked conv M
            cfg["span"] = cfg["m_rows"] + (cfg["k"] - 1) * cfg["igw"]
            A = cfg["conv_rows"]
        assert cfg["span"] + cfg["k"] - 1 <= (b_tile - 1) * cfg["p_in"] + cfg["a_in"]


def _selection_matrix(cfg):
    """0/1 matrix (out_rows, conv_rows): row m picks the conv-grid row of the m-th
    (stride-subsampled, row-major at out_pitch) output position; filler rows pick 0."""
    oh, ow, s, igw, pitch = cfg["oh"], cfg["ow"], cfg["s"], cfg["igw"], cfg["out_pitch"]
    sel = np.zeros((cfg["out_rows"], cfg["conv_rows"]), np.float32)
    for m in range(cfg["out_rows"]):
        i, j = divmod(m, pitch)
        src = i * s * igw + j * s if (i < oh and j < ow) else 0
        sel[m, src] = 1.0
    return jnp.asarray(sel)


def _prep_layer_args(params, cfgs, is_image, mxu_dtype):
    """Trace-time parameter prep: fused-K weight matrices (bf16/f32), f32 biases,
    f32 selection matrices.  /255 is folded into layer-0 weights."""
    args = []
    for li, ((wt, b), cfg) in enumerate(zip(params, cfgs)):
        k, cin, cout = cfg["k"], cfg["cin"], cfg["cout"]
        w = jnp.asarray(wt, jnp.float32)
        # torch (Cout, Cin, KH, KW) -> rows ordered (kw, kh, cin): matches the im2col
        # lane order used in the kernel.
        w2 = jnp.transpose(w, (3, 2, 1, 0)).reshape(k * k * cin, cout)
        if li == 0 and is_image:
            w2 = w2 * (1.0 / 255.0)
        w2 = jnp.pad(w2, ((0, 0), (0, LANES - cout))).astype(mxu_dtype)
        tpg = cfg["taps_per_group"]
        for g in range(len(cfg["groups"])):
            lo = g * tpg * cin
            hi = min((g + 1) * tpg, k * k) * cin
            args.append(w2[lo:hi])
        b2 = jnp.pad(jnp.asarray(b, jnp.float32).reshape(1, cout),
                     ((0, 0), (0, LANES - cout)))
        args.append(b2)
        if cfg["compact"]:
            args.append(_selection_matrix(cfg))
    return args


# ------------------------------ fused kernel --------------------------------

def _build_kernel(cfgs, b_tile, mxu_dtype):
    def kernel(x_ref, *refs):
        o_ref = refs[-1]
        refs = refs[:-1]
        sheet = x_ref[...]                       # (b_tile*in_rows, cin0) f32, stacked images
        ri = 0
        for cfg in cfgs:
            k, cin, igw = cfg["k"], cfg["cin"], cfg["igw"]
            p_in, conv_rows, m_rows = cfg["p_in"], cfg["conv_rows"], cfg["m_rows"]
            span = cfg["span"]
            w_refs = refs[ri:ri + len(cfg["groups"])]
            ri += len(cfg["groups"])
            bias = refs[ri][...]                 # (1, 128) f32
            ri += 1
            sel = None
            if cfg["compact"]:
                sel = refs[ri][...]              # (out_rows, conv_rows) f32
                ri += 1

            # k shifted copies of the sheet (one per kw filter column), not k*k:
            # kw=0 is an aligned prefix; kw>0 are the only row-unaligned copies.
            shifted = [sheet[kw:kw + span, :] for kw in range(k)]

            # Fused-K conv: lane-concat the k*k shifted row-views into an in-register
            # im2col LHS and run ONE MXU matmul per tap-group (contraction k*k*cin).
            acc = None
            for g, taps in enumerate(cfg["groups"]):
                slabs = []
                for (kw, kh) in taps:
                    sk = shifted[kw]
                    if cfg["compact"]:
                        # per-image slabs (aligned offsets b*p_in + kh*igw)
                        pieces = [sk[b * p_in + kh * igw:
                                     b * p_in + kh * igw + conv_rows, :cin]
                                  for b in range(b_tile)]
                        slab = pieces[0] if b_tile == 1 else jnp.concatenate(pieces, axis=0)
                    else:
                        slab = sk[kh * igw: kh * igw + m_rows, :cin]
                    slabs.append(slab)
                lhs = slabs[0] if len(slabs) == 1 else jnp.concatenate(slabs, axis=1)
                d = jnp.dot(lhs.astype(mxu_dtype), w_refs[g][...],
                            preferred_element_type=jnp.float32)
                acc = d if acc is None else acc + d

            if cfg["compact"]:
                # Exact 0/1 row pick on the MXU (stride subsample + row compaction),
                # applied per image on the pre-activation; commutes with bias+ReLU.
                outs = []
                for b in range(b_tile):
                    acc_b = acc[b * conv_rows:(b + 1) * conv_rows, :]
                    sel_b = jnp.dot(sel, acc_b, preferred_element_type=jnp.float32)
                    outs.append(jnp.maximum(sel_b + bias, 0.0))      # f32 VPU math
                if cfg["last"]:
                    for b in range(b_tile):
                        o_ref[b] = outs[b]        # lane-dense (out_rows, 128) store
                else:
                    sheet = outs[0] if b_tile == 1 else jnp.concatenate(outs, axis=0)
            else:
                sheet = jnp.maximum(acc + bias, 0.0)                  # bias + ReLU (f32)
    return kernel


# ------------------------------ public wrapper -------------------------------

def cnn_module_forward(x_nchw, params, strides, paddings, is_image=True,
                       mxu_dtype=jnp.bfloat16):
    """Pallas equivalent of CNNModule.forward (Conv2d+bias+ReLU stack, NCHW flatten).

    mxu_dtype: dtype of the conv-matmul OPERANDS only (accumulation, bias+ReLU and
    the selection matmul stay f32).  bfloat16 (default) halves MXU passes and operand
    traffic on v5e/v6e/v7x; pass jnp.float32 for bit-tight parity with fp32 PyTorch.
    """
    mxu_dtype = jnp.dtype(mxu_dtype)
    N = int(x_nchw.shape[0])
    cfgs, in_rows = _plan(x_nchw.shape, params, strides, paddings)
    cfg0, cfgL = cfgs[0], cfgs[-1]
    cin0 = cfg0["cin"]

    b_tile = _choose_b_tile(N, cfgs, in_rows, cin0)
    _stack_plan(cfgs, in_rows, b_tile)
    n_pad = _round_up(N, b_tile)

    layer_args = _prep_layer_args(params, cfgs, is_image, mxu_dtype)

    # ---- input image -> row-flattened, width/row/batch padded stacked sheet ----
    x = jnp.transpose(x_nchw, (0, 2, 3, 1)).astype(jnp.float32)        # NCHW -> NHWC
    p0 = int(paddings if isinstance(paddings, int) else paddings[0])
    if p0:
        x = jnp.pad(x, ((0, 0), (p0, p0), (p0, p0), (0, 0)))
    if cfg0["igw"] > cfg0["wp"]:                                       # width -> 8-aligned pitch
        x = jnp.pad(x, ((0, 0), (0, 0), (0, cfg0["igw"] - cfg0["wp"]), (0, 0)))
    grid_rows0 = cfg0["hp"] * cfg0["igw"]
    x = x.reshape(N, grid_rows0, cin0)
    if in_rows > grid_rows0:
        x = jnp.pad(x, ((0, 0), (0, in_rows - grid_rows0), (0, 0)))
    elif in_rows < grid_rows0:
        x = x[:, :in_rows, :]
    if n_pad > N:
        x = jnp.pad(x, ((0, n_pad - N), (0, 0), (0, 0)))
    x = x.reshape(n_pad * in_rows, cin0)           # images stacked at pitch in_rows

    kernel = _build_kernel(cfgs, b_tile, mxu_dtype)
    out_rows_l = cfgL["out_rows"]

    in_specs = [pl.BlockSpec((b_tile * in_rows, cin0), lambda g: (g, 0))]
    in_specs += [_const_spec(a.shape) for a in layer_args]

    out = pl.pallas_call(
        kernel,
        out_shape=jax.ShapeDtypeStruct((n_pad, out_rows_l, LANES), jnp.float32),
        grid_spec=pltpu.PrefetchScalarGridSpec(
            num_scalar_prefetch=0,
            grid=(n_pad // b_tile,),
            in_specs=in_specs,
            out_specs=pl.BlockSpec((b_tile, out_rows_l, LANES), lambda g: (g, 0, 0)),
        ),
        compiler_params=pltpu.CompilerParams(
            dimension_semantics=("parallel",),         # batch tiles across TCs (v7x)
            vmem_limit_bytes=32 * 1024 * 1024,         # explicit; well under v7x's 64 MiB/TC
        ),
    )(x, *layer_args)

    # NHWC feature rows -> NCHW flatten; tiny lane-dense tensor, handled by XLA.
    m_last = cfgL["oh"] * cfgL["ow"]
    out = out[:N, :m_last, :cfgL["cout"]]
    out = out.reshape(N, cfgL["oh"], cfgL["ow"], cfgL["cout"])
    out = jnp.transpose(out, (0, 3, 1, 2)).reshape(N, cfgL["cout"] * m_last)
    return out


# ------------------------------ test harness --------------------------------

def _xavier_uniform(key, shape):
    cout, cin, kh, kw = shape
    fan_in, fan_out = cin * kh * kw, cout * kh * kw
    bound = (6.0 / (fan_in + fan_out)) ** 0.5
    return jax.random.uniform(key, shape, jnp.float32, -bound, bound)


def _make_params(key, in_c, hidden, ks):
    params, prev = [], in_c
    for ch, k in zip(hidden, ks):
        key, sub = jax.random.split(key)
        params.append((_xavier_uniform(sub, (ch, prev, k, k)), jnp.zeros((ch,), jnp.float32)))
        prev = ch
    return params


def _reference_forward(x, params, strides, paddings, is_image=True):
    """Pure-JAX reference mirroring the PyTorch forward (f32, HIGHEST precision)."""
    if is_image:
        x = x / 255.0
    for i, (w, b) in enumerate(params):
        p = paddings if isinstance(paddings, int) else paddings[i]
        x = jax.lax.conv_general_dilated(
            x, w, (strides[i], strides[i]), [(p, p), (p, p)],
            dimension_numbers=("NCHW", "OIHW", "NCHW"),
            precision=jax.lax.Precision.HIGHEST)
        x = jnp.maximum(x + b.reshape(1, -1, 1, 1), 0.0)
    return x.reshape(x.shape[0], -1)


if __name__ == "__main__":
    key = jax.random.PRNGKey(0)
    k_x1, k_p1, k_x2 = jax.random.split(key, 3)

    # ---- Config 1: CNNModule(input_var=(2,4,16,16), hidden_channels=(8,16),
    #                          kernel_sizes=(3,3), strides=(1,2), paddings=0) ----
    x1 = jax.random.uniform(k_x1, (2, 4, 16, 16), jnp.float32, 0.0, 255.0)
    params1 = _make_params(k_p1, 4, (8, 16), (3, 3))
    strides1, pads1 = (1, 2), (0, 0)

    fwd1_f32 = jax.jit(lambda xx, pp: cnn_module_forward(
        xx, pp, strides1, pads1, mxu_dtype=jnp.float32))
    out1 = jax.block_until_ready(fwd1_f32(x1, params1))
    ref1 = _reference_forward(x1, params1, strides1, pads1)
    assert out1.shape == ref1.shape, (out1.shape, ref1.shape)
    err1 = float(jnp.max(jnp.abs(out1 - ref1)))
    assert jnp.allclose(out1, ref1, atol=1e-4, rtol=1e-4), err1

    # bf16-MXU-operand path (default): accumulation / VPU math stay f32 -> loose check.
    fwd1_bf16 = jax.jit(lambda xx, pp: cnn_module_forward(xx, pp, strides1, pads1))
    out1b = jax.block_until_ready(fwd1_bf16(x1, params1))
    assert out1b.shape == ref1.shape
    err1b = float(jnp.max(jnp.abs(out1b - ref1)))
    assert np.isfinite(err1b) and err1b < 0.5, err1b

    # ---- Config 2: exercises layer-0 zero padding, a strided middle layer (compact
    #      intermediate grid), 3 layers, batch stacking (B_TILE=2) and batch padding ----
    x2 = jax.random.uniform(k_x2, (5, 3, 12, 12), jnp.float32, 0.0, 255.0)
    params2 = _make_params(jax.random.PRNGKey(1), 3, (8, 12, 16), (3, 3, 3))
    strides2, pads2 = (1, 2, 1), (1, 0, 0)

    fwd2_f32 = jax.jit(lambda xx, pp: cnn_module_forward(
        xx, pp, strides2, pads2, mxu_dtype=jnp.float32))
    out2 = jax.block_until_ready(fwd2_f32(x2, params2))
    ref2 = _reference_forward(x2, params2, strides2, pads2)
    assert out2.shape == ref2.shape, (out2.shape, ref2.shape)
    err2 = float(jnp.max(jnp.abs(out2 - ref2)))
    assert jnp.allclose(out2, ref2, atol=1e-4, rtol=1e-4), err2

    print("KERNEL_OK")
</pallas_src>

<mosaic_0001>
module attributes {stable_mosaic.version = 11 : i64} {
  func.func @kernel(%arg0: i32, %arg1: memref<256x4xf32, #tpu.memory_space<vmem>>, %arg2: memref<36x128xf32, #tpu.memory_space<vmem>>, %arg3: memref<1x128xf32, #tpu.memory_space<vmem>>, %arg4: memref<72x128xf32, #tpu.memory_space<vmem>>, %arg5: memref<1x128xf32, #tpu.memory_space<vmem>>, %arg6: memref<40x176xf32, #tpu.memory_space<vmem>>, %arg7: memref<1x40x128xf32, #tpu.memory_space<vmem>>) attributes {dimension_semantics = [#tpu.dimension_semantics<parallel>], iteration_bounds = array<i64: 2>, scalar_prefetch = 0 : i64, scratch_operands = 0 : i64, tpu.core_type = #tpu.core_type<tc>, window_params = [{transform_indices = @transform_0, window_bounds = array<i64: 256, 4>}, {pipeline_mode = #tpu.pipeline_mode<synchronous>, transform_indices = @transform_1, window_bounds = array<i64: 36, 128>}, {pipeline_mode = #tpu.pipeline_mode<synchronous>, transform_indices = @transform_2, window_bounds = array<i64: 1, 128>}, {pipeline_mode = #tpu.pipeline_mode<synchronous>, transform_indices = @transform_3, window_bounds = array<i64: 72, 128>}, {pipeline_mode = #tpu.pipeline_mode<synchronous>, transform_indices = @transform_4, window_bounds = array<i64: 1, 128>}, {pipeline_mode = #tpu.pipeline_mode<synchronous>, transform_indices = @transform_5, window_bounds = array<i64: 40, 176>}, {transform_indices = @transform_6, window_bounds = array<i64: 1, 40, 128>}]} {
    %c0 = arith.constant 0 : index
    %c0_0 = arith.constant 0 : index
    %0 = vector.load %arg1[%c0, %c0_0] : memref<256x4xf32, #tpu.memory_space<vmem>>, vector<256x4xf32>
    %c0_1 = arith.constant 0 : index
    %c0_2 = arith.constant 0 : index
    %1 = vector.load %arg3[%c0_1, %c0_2] : memref<1x128xf32, #tpu.memory_space<vmem>>, vector<1x128xf32>
    %2 = vector.extract_strided_slice %0 {offsets = [0, 0], sizes = [248, 4], strides = [1, 1]} : vector<256x4xf32> to vector<248x4xf32>
    %3 = vector.extract_strided_slice %0 {offsets = [1, 0], sizes = [248, 4], strides = [1, 1]} : vector<256x4xf32> to vector<248x4xf32>
    %4 = vector.extract_strided_slice %0 {offsets = [2, 0], sizes = [248, 4], strides = [1, 1]} : vector<256x4xf32> to vector<248x4xf32>
    %5 = vector.extract_strided_slice %2 {offsets = [0, 0], sizes = [216, 4], strides = [1, 1]} : vector<248x4xf32> to vector<216x4xf32>
    %6 = vector.extract_strided_slice %2 {offsets = [16, 0], sizes = [216, 4], strides = [1, 1]} : vector<248x4xf32> to vector<216x4xf32>
    %7 = vector.extract_strided_slice %2 {offsets = [32, 0], sizes = [216, 4], strides = [1, 1]} : vector<248x4xf32> to vector<216x4xf32>
    %8 = vector.extract_strided_slice %3 {offsets = [0, 0], sizes = [216, 4], strides = [1, 1]} : vector<248x4xf32> to vector<216x4xf32>
    %9 = vector.extract_strided_slice %3 {offsets = [16, 0], sizes = [216, 4], strides = [1, 1]} : vector<248x4xf32> to vector<216x4xf32>
    %10 = vector.extract_strided_slice %3 {offsets = [32, 0], sizes = [216, 4], strides = [1, 1]} : vector<248x4xf32> to vector<216x4xf32>
    %11 = vector.extract_strided_slice %4 {offsets = [0, 0], sizes = [216, 4], strides = [1, 1]} : vector<248x4xf32> to vector<216x4xf32>
    %12 = vector.extract_strided_slice %4 {offsets = [16, 0], sizes = [216, 4], strides = [1, 1]} : vector<248x4xf32> to vector<216x4xf32>
    %13 = vector.extract_strided_slice %4 {offsets = [32, 0], sizes = [216, 4], strides = [1, 1]} : vector<248x4xf32> to vector<216x4xf32>
    %14 = tpu.concatenate %5, %6, %7, %8, %9, %10, %11, %12, %13 in 1 : vector<216x4xf32>, vector<216x4xf32>, vector<216x4xf32>, vector<216x4xf32>, vector<216x4xf32>, vector<216x4xf32>, vector<216x4xf32>, vector<216x4xf32>, vector<216x4xf32> -> vector<216x36xf32>
    %c0_3 = arith.constant 0 : index
    %c0_4 = arith.constant 0 : index
    %15 = vector.load %arg2[%c0_3, %c0_4] : memref<36x128xf32, #tpu.memory_space<vmem>>, vector<36x128xf32>
    %cst = arith.constant dense<0.000000e+00> : vector<216x128xf32>
    %16 = tpu.matmul %14, %15, %cst {dimension_numbers = #tpu.dot_dimension_numbers<[1], [0], [0], [1], [0, 0, 1, 1], [], []>} : vector<216x36xf32>, vector<36x128xf32>, vector<216x128xf32> -> vector<216x128xf32>
    %17 = vector.broadcast %1 : vector<1x128xf32> to vector<216x128xf32>
    %18 = arith.addf %16, %17 : vector<216x128xf32>
    %cst_5 = arith.constant 0.000000e+00 : f32
    %19 = vector.broadcast %cst_5 : f32 to vector<216x128xf32>
    %20 = arith.maximumf %18, %19 : vector<216x128xf32>
    %c0_6 = arith.constant 0 : index
    %c0_7 = arith.constant 0 : index
    %21 = vector.load %arg5[%c0_6, %c0_7] : memref<1x128xf32, #tpu.memory_space<vmem>>, vector<1x128xf32>
    %c0_8 = arith.constant 0 : index
    %c0_9 = arith.constant 0 : index
    %22 = vector.load %arg6[%c0_8, %c0_9] : memref<40x176xf32, #tpu.memory_space<vmem>>, vector<40x176xf32>
    %23 = vector.extract_strided_slice %20 {offsets = [0, 0], sizes = [208, 128], strides = [1, 1]} : vector<216x128xf32> to vector<208x128xf32>
    %24 = vector.extract_strided_slice %20 {offsets = [1, 0], sizes = [208, 128], strides = [1, 1]} : vector<216x128xf32> to vector<208x128xf32>
    %25 = vector.extract_strided_slice %20 {offsets = [2, 0], sizes = [208, 128], strides = [1, 1]} : vector<216x128xf32> to vector<208x128xf32>
    %26 = vector.extract_strided_slice %23 {offsets = [0, 0], sizes = [176, 8], strides = [1, 1]} : vector<208x128xf32> to vector<176x8xf32>
    %27 = vector.extract_strided_slice %23 {offsets = [16, 0], sizes = [176, 8], strides = [1, 1]} : vector<208x128xf32> to vector<176x8xf32>
    %28 = vector.extract_strided_slice %23 {offsets = [32, 0], sizes = [176, 8], strides = [1, 1]} : vector<208x128xf32> to vector<176x8xf32>
    %29 = vector.extract_strided_slice %24 {offsets = [0, 0], sizes = [176, 8], strides = [1, 1]} : vector<208x128xf32> to vector<176x8xf32>
    %30 = vector.extract_strided_slice %24 {offsets = [16, 0], sizes = [176, 8], strides = [1, 1]} : vector<208x128xf32> to vector<176x8xf32>
    %31 = vector.extract_strided_slice %24 {offsets = [32, 0], sizes = [176, 8], strides = [1, 1]} : vector<208x128xf32> to vector<176x8xf32>
    %32 = vector.extract_strided_slice %25 {offsets = [0, 0], sizes = [176, 8], strides = [1, 1]} : vector<208x128xf32> to vector<176x8xf32>
    %33 = vector.extract_strided_slice %25 {offsets = [16, 0], sizes = [176, 8], strides = [1, 1]} : vector<208x128xf32> to vector<176x8xf32>
    %34 = vector.extract_strided_slice %25 {offsets = [32, 0], sizes = [176, 8], strides = [1, 1]} : vector<208x128xf32> to vector<176x8xf32>
    %35 = tpu.concatenate %26, %27, %28, %29, %30, %31, %32, %33, %34 in 1 : vector<176x8xf32>, vector<176x8xf32>, vector<176x8xf32>, vector<176x8xf32>, vector<176x8xf32>, vector<176x8xf32>, vector<176x8xf32>, vector<176x8xf32>, vector<176x8xf32> -> vector<176x72xf32>
    %c0_10 = arith.constant 0 : index
    %c0_11 = arith.constant 0 : index
    %36 = vector.load %arg4[%c0_10, %c0_11] : memref<72x128xf32, #tpu.memory_space<vmem>>, vector<72x128xf32>
    %cst_12 = arith.constant dense<0.000000e+00> : vector<176x128xf32>
    %37 = tpu.matmul %35, %36, %cst_12 {dimension_numbers = #tpu.dot_dimension_numbers<[1], [0], [0], [1], [0, 0, 1, 1], [], []>} : vector<176x72xf32>, vector<72x128xf32>, vector<176x128xf32> -> vector<176x128xf32>
    %cst_13 = arith.constant dense<0.000000e+00> : vector<40x128xf32>
    %38 = tpu.matmul %22, %37, %cst_13 {dimension_numbers = #tpu.dot_dimension_numbers<[1], [0], [0], [1], [0, 0, 1, 1], [], []>} : vector<40x176xf32>, vector<176x128xf32>, vector<40x128xf32> -> vector<40x128xf32>
    %39 = vector.broadcast %21 : vector<1x128xf32> to vector<40x128xf32>
    %40 = arith.addf %38, %39 : vector<40x128xf32>
    %cst_14 = arith.constant 0.000000e+00 : f32
    %41 = vector.broadcast %cst_14 : f32 to vector<40x128xf32>
    %42 = arith.maximumf %40, %41 : vector<40x128xf32>
    %c0_15 = arith.constant 0 : index
    %c0_16 = arith.constant 0 : index
    %c0_17 = arith.constant 0 : index
    %43 = vector.load %arg7[%c0_15, %c0_16, %c0_17] : memref<1x40x128xf32, #tpu.memory_space<vmem>>, vector<1x40x128xf32>
    %44 = vector.shape_cast %43 : vector<1x40x128xf32> to vector<40x128xf32>
    %45 = vector.shape_cast %42 : vector<40x128xf32> to vector<1x40x128xf32>
    tpu.vector_store %arg7[%c0_15, %c0_16, %c0_17], %45 {strides = array<i32>} : memref<1x40x128xf32, #tpu.memory_space<vmem>>, vector<1x40x128xf32>,
    return
  }
  func.func @transform_0(%arg0: i32) -> (i32, i32) {
    %c0_i32 = arith.constant 0 : i32
    %c0_i32_0 = arith.constant 0 : i32
    return %arg0, %c0_i32 : i32, i32
  }
  func.func @transform_1(%arg0: i32) -> (i32, i32) {
    %c0_i32 = arith.constant 0 : i32
    %c0_i32_0 = arith.constant 0 : i32
    %c0_i32_1 = arith.constant 0 : i32
    return %c0_i32, %c0_i32_0 : i32, i32
  }
  func.func @transform_2(%arg0: i32) -> (i32, i32) {
    %c0_i32 = arith.constant 0 : i32
    %c0_i32_0 = arith.constant 0 : i32
    %c0_i32_1 = arith.constant 0 : i32
    return %c0_i32, %c0_i32_0 : i32, i32
  }
  func.func @transform_3(%arg0: i32) -> (i32, i32) {
    %c0_i32 = arith.constant 0 : i32
    %c0_i32_0 = arith.constant 0 : i32
    %c0_i32_1 = arith.constant 0 : i32
    return %c0_i32, %c0_i32_0 : i32, i32
  }
  func.func @transform_4(%arg0: i32) -> (i32, i32) {
    %c0_i32 = arith.constant 0 : i32
    %c0_i32_0 = arith.constant 0 : i32
    %c0_i32_1 = arith.constant 0 : i32
    return %c0_i32, %c0_i32_0 : i32, i32
  }
  func.func @transform_5(%arg0: i32) -> (i32, i32) {
    %c0_i32 = arith.constant 0 : i32
    %c0_i32_0 = arith.constant 0 : i32
    %c0_i32_1 = arith.constant 0 : i32
    return %c0_i32, %c0_i32_0 : i32, i32
  }
  func.func @transform_6(%arg0: i32) -> (i32, i32, i32) {
    %c0_i32 = arith.constant 0 : i32
    %c0_i32_0 = arith.constant 0 : i32
    %c0_i32_1 = arith.constant 0 : i32
    return %arg0, %c0_i32, %c0_i32_0 : i32, i32, i32
  }
}

</mosaic_0001>

<llo_original>
// kernel: _lambda_.1
$region0: #{_lambda_.1}
  #allocation0 [shape = 'u32[]', space=smem, size = 0x4, offset = 0x4, fixed_abs, tag = 'smem constant byte address 0x4 - core index']
  #allocation1 [shape = 'u32[144,128]{1,0:T(1,128)}', space=vmem, size = 0x12000, scoped, tag = 'internal scratch']
  %s0 = inlined_call_operand.vmem [shape: f32[512,4], index: 0, kind: input, shape index: {}]
  %s1 = inlined_call_operand.vmem [shape: f32[36,128], index: 1, kind: input, shape index: {}]
  %s2 = inlined_call_operand.vmem [shape: f32[1,128], index: 2, kind: input, shape index: {}]
  %s3 = inlined_call_operand.vmem [shape: f32[72,128], index: 3, kind: input, shape index: {}]
  %s4 = inlined_call_operand.vmem [shape: f32[1,128], index: 4, kind: input, shape index: {}]
  %s5 = inlined_call_operand.vmem [shape: f32[40,176], index: 5, kind: input, shape index: {}]
  %s6 = inlined_call_operand.vmem [shape: f32[2,40,128], index: 6, kind: output, shape index: {}]
  %s7 = sld [smem:[#allocation0]]
  $region57: #{_lambda_.1} parent=0
    _
  %s9 = ssub.s32 1, %s7
  %s10 = scalar_select 0, %s9, %s7
  loop: start=0, step=1, limit=4
  $region2: #{_lambda_.1} parent=0 // loop_pre_header
    _
  $region3: #{_lambda_.1} parent=0 // loop_header
    %s12 = sphi 0, %s16
    %p13 = scmp.ge.s32.totalorder %s12, 4
    %s22 = sphi 0, %s24
    %s25 = sphi 0, %s22
    %s26 = sphi 0, %s25
    %s42 = sphi 0, %s26
    %s46 = sphi 0, %s46
    %s48 = sphi 0, %s46
    %s49 = sphi 0, %s48
    %s63 = sphi 0, %s49
    %s67 = sphi 0, %s67
    %s69 = sphi 0, %s67
    %s70 = sphi 0, %s69
    %s84 = sphi 0, %s70
    %s88 = sphi 0, %s88
    %s90 = sphi 0, %s88
    %s91 = sphi 0, %s90
    %s105 = sphi 0, %s91
    %s109 = sphi 0, %s109
    %s111 = sphi 0, %s109
    %s112 = sphi 0, %s111
    %s126 = sphi 0, %s112
    %s130 = sphi 0, %s130
    %s132 = sphi 0, %s130
    %s133 = sphi 0, %s132
    %s147 = sphi 0, %s133
    %s153 = sphi 0, %s155
    %s156 = sphi 0, %s153
    %s157 = sphi 0, %s156
    %s173 = sphi 0, %s157
  $region4: #{_lambda_.1} parent=0 // loop_header_branch
    %15 = sbr.rel (%p13) target = $region8
  $region5: #{_lambda_.1} parent=0 // loop_body
    %s17 = ssub.s32 %s12, 1
    %s18 = ssub.s32 %s12, 2
    %s19 = sadd.s32 %s12, 1
    %s20 = ssub.s32 %s12, %s19
    %p21 = scmp.eq.s32.totalorder %s20, 0
    %s23 = sadd.s32 %s22, 1
    %s24 = scalar_select %p21, %s22, %s23
    %p27 = pneg %p21
    %p28 = scmp.eq.s32.totalorder %s12, 1
    %p29 = por %p27, %p28
    %p30 = scmp.ne.s32.totalorder %s22, %s25
    %p31 = scmp.eq.s32.totalorder %s12, 0
    %p32 = por %p30, %p31
    %p33 = scmp.ne.s32.totalorder %s22, %s25
    %p34 = scmp.eq.s32.totalorder %s17, 1
    %p35 = por %p33, %p34
    %p36 = scmp.ne.s32.totalorder %s25, %s26
    %p37 = scmp.eq.s32.totalorder %s17, 0
    %p38 = por %p36, %p37
    %p39 = scmp.ne.s32.totalorder %s25, %s26
    %p40 = scmp.eq.s32.totalorder %s18, 1
    %p41 = por %p39, %p40
    %p43 = scmp.ne.s32.totalorder %s26, %s42
    %p44 = scmp.eq.s32.totalorder %s18, 0
    %p45 = por %p43, %p44
    %s47 = sadd.s32 %s46, 1
    %p50 = scmp.eq.s32.totalorder %s12, 1
    %p51 = scmp.ne.s32.totalorder %s46, %s48
    %p52 = scmp.eq.s32.totalorder %s12, 0
    %p53 = por %p51, %p52
    %p54 = scmp.ne.s32.totalorder %s46, %s48
    %p55 = scmp.eq.s32.totalorder %s17, 1
    %p56 = por %p54, %p55
    %p57 = scmp.ne.s32.totalorder %s48, %s49
    %p58 = scmp.eq.s32.totalorder %s17, 0
    %p59 = por %p57, %p58
    %p60 = scmp.ne.s32.totalorder %s48, %s49
    %p61 = scmp.eq.s32.totalorder %s18, 1
    %p62 = por %p60, %p61
    %p64 = scmp.ne.s32.totalorder %s49, %s63
    %p65 = scmp.eq.s32.totalorder %s18, 0
    %p66 = por %p64, %p65
    %s68 = sadd.s32 %s67, 1
    %p71 = scmp.eq.s32.totalorder %s12, 1
    %p72 = scmp.ne.s32.totalorder %s67, %s69
    %p73 = scmp.eq.s32.totalorder %s12, 0
    %p74 = por %p72, %p73
    %p75 = scmp.ne.s32.totalorder %s67, %s69
    %p76 = scmp.eq.s32.totalorder %s17, 1
    %p77 = por %p75, %p76
    %p78 = scmp.ne.s32.totalorder %s69, %s70
    %p79 = scmp.eq.s32.totalorder %s17, 0
    %p80 = por %p78, %p79
    %p81 = scmp.ne.s32.totalorder %s69, %s70
    %p82 = scmp.eq.s32.totalorder %s18, 1
    %p83 = por %p81, %p82
    %p85 = scmp.ne.s32.totalorder %s70, %s84
    %p86 = scmp.eq.s32.totalorder %s18, 0
    %p87 = por %p85, %p86
    %s89 = sadd.s32 %s88, 1
    %p92 = scmp.eq.s32.totalorder %s12, 1
    %p93 = scmp.ne.s32.totalorder %s88, %s90
    %p94 = scmp.eq.s32.totalorder %s12, 0
    %p95 = por %p93, %p94
    %p96 = scmp.ne.s32.totalorder %s88, %s90
    %p97 = scmp.eq.s32.totalorder %s17, 1
    %p98 = por %p96, %p97
    %p99 = scmp.ne.s32.totalorder %s90, %s91
    %p100 = scmp.eq.s32.totalorder %s17, 0
    %p101 = por %p99, %p100
    %p102 = scmp.ne.s32.totalorder %s90, %s91
    %p103 = scmp.eq.s32.totalorder %s18, 1
    %p104 = por %p102, %p103
    %p106 = scmp.ne.s32.totalorder %s91, %s105
    %p107 = scmp.eq.s32.totalorder %s18, 0
    %p108 = por %p106, %p107
    %s110 = sadd.s32 %s109, 1
    %p113 = scmp.eq.s32.totalorder %s12, 1
    %p114 = scmp.ne.s32.totalorder %s109, %s111
    %p115 = scmp.eq.s32.totalorder %s12, 0
    %p116 = por %p114, %p115
    %p117 = scmp.ne.s32.totalorder %s109, %s111
    %p118 = scmp.eq.s32.totalorder %s17, 1
    %p119 = por %p117, %p118
    %p120 = scmp.ne.s32.totalorder %s111, %s112
    %p121 = scmp.eq.s32.totalorder %s17, 0
    %p122 = por %p120, %p121
    %p123 = scmp.ne.s32.totalorder %s111, %s112
    %p124 = scmp.eq.s32.totalorder %s18, 1
    %p125 = por %p123, %p124
    %p127 = scmp.ne.s32.totalorder %s112, %s126
    %p128 = scmp.eq.s32.totalorder %s18, 0
    %p129 = por %p127, %p128
    %s131 = sadd.s32 %s130, 1
    %p134 = scmp.eq.s32.totalorder %s12, 1
    %p135 = scmp.ne.s32.totalorder %s130, %s132
    %p136 = scmp.eq.s32.totalorder %s12, 0
    %p137 = por %p135, %p136
    %p138 = scmp.ne.s32.totalorder %s130, %s132
    %p139 = scmp.eq.s32.totalorder %s17, 1
    %p140 = por %p138, %p139
    %p141 = scmp.ne.s32.totalorder %s132, %s133
    %p142 = scmp.eq.s32.totalorder %s17, 0
    %p143 = por %p141, %p142
    %p144 = scmp.ne.s32.totalorder %s132, %s133
    %p145 = scmp.eq.s32.totalorder %s18, 1
    %p146 = por %p144, %p145
    %p148 = scmp.ne.s32.totalorder %s133, %s147
    %p149 = scmp.eq.s32.totalorder %s18, 0
    %p150 = por %p148, %p149
    %s151 = ssub.s32 %s12, %s19
    %p152 = scmp.eq.s32.totalorder %s151, 0
    %s154 = sadd.s32 %s153, 1
    %s155 = scalar_select %p152, %s153, %s154
    %p158 = pneg %p152
    %p159 = scmp.eq.s32.totalorder %s12, 1
    %p160 = por %p158, %p159
    %p161 = scmp.ne.s32.totalorder %s153, %s156
    %p162 = scmp.eq.s32.totalorder %s12, 0
    %p163 = por %p161, %p162
    %p164 = scmp.ne.s32.totalorder %s153, %s156
    %p165 = scmp.eq.s32.totalorder %s17, 1
    %p166 = por %p164, %p165
    %p167 = scmp.ne.s32.totalorder %s156, %s157
    %p168 = scmp.eq.s32.totalorder %s17, 0
    %p169 = por %p167, %p168
    %p170 = scmp.ne.s32.totalorder %s156, %s157
    %p171 = scmp.eq.s32.totalorder %s18, 1
    %p172 = por %p170, %p171
    %p174 = scmp.ne.s32.totalorder %s157, %s173
    %p175 = scmp.eq.s32.totalorder %s18, 0
    %p176 = por %p174, %p175
    %p177 = scmp.le.s32.totalorder 1, %s12
    %p178 = scmp.lt.s32.totalorder %s12, 3
    %p179 = pnand %p177, %p178
    %p180 = pneg %p179
    // Predicated region
    $region9: #{_lambda_.1} parent=5 // pred_check
      _
    $region10: #{_lambda_.1} parent=5 // pred_check_branch
      %182 = sbr.rel (%p179) target = $region12
    $region11: #{_lambda_.1} parent=5 // pred_region
      %s183 = ssub.s32 %s12, 1
      // Predicated region
      $region13: #{_lambda_.1} parent=11 // pred_check
        %p184 = pneg %p59
      $region14: #{_lambda_.1} parent=11 // pred_check_branch
        %186 = sbr.rel (%p184) target = $region16
      $region15: #{_lambda_.1} parent=11 // pred_region
        _
      $region16: #{_lambda_.1} parent=11 // pred_fallthru
        _
      // Predicated region
      $region17: #{_lambda_.1} parent=11 // pred_check
        %p187 = pneg %p80
      $region18: #{_lambda_.1} parent=11 // pred_check_branch
        %189 = sbr.rel (%p187) target = $region20
      $region19: #{_lambda_.1} parent=11 // pred_region
        _
      $region20: #{_lambda_.1} parent=11 // pred_fallthru
        _
      // Predicated region
      $region21: #{_lambda_.1} parent=11 // pred_check
        %p190 = pneg %p101
      $region22: #{_lambda_.1} parent=11 // pred_check_branch
        %192 = sbr.rel (%p190) target = $region24
      $region23: #{_lambda_.1} parent=11 // pred_region
        _
      $region24: #{_lambda_.1} parent=11 // pred_fallthru
        _
      // Predicated region
      $region25: #{_lambda_.1} parent=11 // pred_check
        %p193 = pneg %p122
      $region26: #{_lambda_.1} parent=11 // pred_check_branch
        %195 = sbr.rel (%p193) target = $region28
      $region27: #{_lambda_.1} parent=11 // pred_region
        _
      $region28: #{_lambda_.1} parent=11 // pred_fallthru
        _
      // Predicated region
      $region29: #{_lambda_.1} parent=11 // pred_check
        %p196 = pneg %p143
      $region30: #{_lambda_.1} parent=11 // pred_check_branch
        %198 = sbr.rel (%p196) target = $region32
      $region31: #{_lambda_.1} parent=11 // pred_region
        _
      $region32: #{_lambda_.1} parent=11 // pred_fallthru
        _
    $region12: #{_lambda_.1} parent=5 // pred_fallthru
      _
    %p199 = scmp.lt.s32.totalorder %s12, 2
    // Predicated region
    $region33: #{_lambda_.1} parent=5 // pred_check
      %p200 = pneg %p199
    $region34: #{_lambda_.1} parent=5 // pred_check_branch
      %202 = sbr.rel (%p200) target = $region36
    $region35: #{_lambda_.1} parent=5 // pred_region
      // Predicated region
      $region37: #{_lambda_.1} parent=35 // pred_check
        %p203 = pneg %p32
      $region38: #{_lambda_.1} parent=35 // pred_check_branch
        %205 = sbr.rel (%p203) target = $region40
      $region39: #{_lambda_.1} parent=35 // pred_region
        %s206 = smul.u32 32, %s12
        %p207 = scmp.lt.s32.totalorder %s206, 63
        %s208 = scalar_select %p207, %s206, 63
        %s209 = smul.addr %s208, 8
        %s210 = scalar_lea.vmem %s0, %s209
        %s211 = smul.u32 32, %s12
      $region40: #{_lambda_.1} parent=35 // pred_fallthru
        _
    $region36: #{_lambda_.1} parent=5 // pred_fallthru
      _
    %p212 = scmp.le.s32.totalorder 1, %s12
    %p213 = scmp.lt.s32.totalorder %s12, 3
    %p214 = pnand %p212, %p213
    %p215 = pneg %p214
    // Predicated region
    $region41: #{_lambda_.1} parent=5 // pred_check
      _
    $region42: #{_lambda_.1} parent=5 // pred_check_branch
      %217 = sbr.rel (%p214) target = $region44
    $region43: #{_lambda_.1} parent=5 // pred_region
      %s218 = ssub.s32 %s12, 1
      %s219 = smul.u32 32, %s17
      %p220 = scmp.lt.s32.totalorder %s219, 63
      %s221 = scalar_select %p220, %s219, 63
      %s222 = smul.addr %s221, 8
      %s223 = scalar_lea.vmem %s0, %s222
      %p224 = pneg %p38
      %p225 = pneg %p35
      %p226 = pneg %p59
      %p227 = pneg %p56
      %p228 = pneg %p80
      %p229 = pneg %p77
      %p230 = pneg %p101
      %p231 = pneg %p98
      %p232 = pneg %p122
      %p233 = pneg %p119
      %p234 = pneg %p143
      %p235 = pneg %p140
      %p236 = pneg %p169
      %p237 = pneg %p166
      %p238 = scmp.lt.s32.totalorder %s17, 1
      %s239 = scalar_select %p238, %s17, 1
      %s240 = smul.addr %s239, 5
      %s241 = smul.addr %s240, 8
      %s242 = scalar_lea.vmem %s6, %s241
      %s243 = smul.u32 32, %s17
      %p244 = scmp.lt.s32.totalorder %s243, 63
      %s245 = scalar_select %p244, %s243, 63
      %s246 = smul.addr %s245, 8
      %s247 = scalar_lea.vmem %s0, %s246
      %s248 = smul.u32 32, %s17
      %p249 = scmp.lt.s32.totalorder %s17, 1
      %s250 = scalar_select %p249, %s17, 1
      %s251 = smul.addr %s250, 5
      %s252 = smul.addr %s251, 8
      %s253 = scalar_lea.vmem %s6, %s252
      %v254 = vld [vmem:[%s247] sm:$0xff]
      %v255 = vld [vmem:[%s247 + $0x8] sm:$0xff]
      %v256 = vld [vmem:[%s247 + $0x10] sm:$0xff]
      %v257 = vld [vmem:[%s247 + $0x18] sm:$0xff]
      %v258 = vld [vmem:[%s247 + $0x20] sm:$0xff]
      %v259 = vld [vmem:[%s247 + $0x28] sm:$0xff]
      %v260 = vld [vmem:[%s247 + $0x30] sm:$0xff]
      %v261 = vld [vmem:[%s247 + $0x38] sm:$0xff]
      %v262 = vld [vmem:[%s247 + $0x40] sm:$0xff]
      %v263 = vld [vmem:[%s247 + $0x48] sm:$0xff]
      %v264 = vld [vmem:[%s247 + $0x50] sm:$0xff]
      %v265 = vld [vmem:[%s247 + $0x58] sm:$0xff]
      %v266 = vld [vmem:[%s247 + $0x60] sm:$0xff]
      %v267 = vld [vmem:[%s247 + $0x68] sm:$0xff]
      %v268 = vld [vmem:[%s247 + $0x70] sm:$0xff]
      %v269 = vld [vmem:[%s247 + $0x78] sm:$0xff]
      %v270 = vld [vmem:[%s247 + $0x80] sm:$0xff]
      %v271 = vld [vmem:[%s247 + $0x88] sm:$0xff]
      %v272 = vld [vmem:[%s247 + $0x90] sm:$0xff]
      %v273 = vld [vmem:[%s247 + $0x98] sm:$0xff]
      %v274 = vld [vmem:[%s247 + $0xa0] sm:$0xff]
      %v275 = vld [vmem:[%s247 + $0xa8] sm:$0xff]
      %v276 = vld [vmem:[%s247 + $0xb0] sm:$0xff]
      %v277 = vld [vmem:[%s247 + $0xb8] sm:$0xff]
      %v278 = vld [vmem:[%s247 + $0xc0] sm:$0xff]
      %v279 = vld [vmem:[%s247 + $0xc8] sm:$0xff]
      %v280 = vld [vmem:[%s247 + $0xd0] sm:$0xff]
      %v281 = vld [vmem:[%s247 + $0xd8] sm:$0xff]
      %v282 = vld [vmem:[%s247 + $0xe0] sm:$0xff]
      %v283 = vld [vmem:[%s247 + $0xe8] sm:$0xff]
      %v284 = vld [vmem:[%s247 + $0xf0] sm:$0xff]
      %v285 = vld [vmem:[%s247 + $0xf8] sm:$0xff]
      %v286 = vld [vmem:[%s2] sm:$0x1]
      %314 = vrot.lane.b32.xlu0 %v256, 4
      %v315 = vpop.permute.xlu0 %314
      %316 = vrot.lane.b32.xlu0 %v257, 4
      %v317 = vpop.permute.xlu0 %316
      %318 = vrot.lane.b32.xlu0 %v258, 4
      %v319 = vpop.permute.xlu0 %318
      %320 = vrot.lane.b32.xlu0 %v259, 4
      %v321 = vpop.permute.xlu0 %320
      %322 = vrot.lane.b32.xlu0 %v260, 4
      %v323 = vpop.permute.xlu0 %322
      %324 = vrot.lane.b32.xlu0 %v261, 4
      %v325 = vpop.permute.xlu0 %324
      %326 = vrot.lane.b32.xlu0 %v262, 4
      %v327 = vpop.permute.xlu0 %326
      %328 = vrot.lane.b32.xlu0 %v263, 4
      %v329 = vpop.permute.xlu0 %328
      %330 = vrot.lane.b32.xlu0 %v264, 4
      %v331 = vpop.permute.xlu0 %330
      %332 = vrot.lane.b32.xlu0 %v265, 4
      %v333 = vpop.permute.xlu0 %332
      %334 = vrot.lane.b32.xlu0 %v266, 4
      %v335 = vpop.permute.xlu0 %334
      %336 = vrot.lane.b32.xlu0 %v267, 4
      %v337 = vpop.permute.xlu0 %336
      %338 = vrot.lane.b32.xlu0 %v268, 4
      %v339 = vpop.permute.xlu0 %338
      %340 = vrot.lane.b32.xlu0 %v269, 4
      %v341 = vpop.permute.xlu0 %340
      %342 = vrot.lane.b32.xlu0 %v270, 4
      %v343 = vpop.permute.xlu0 %342
      %344 = vrot.lane.b32.xlu0 %v271, 4
      %v345 = vpop.permute.xlu0 %344
      %346 = vrot.lane.b32.xlu0 %v272, 4
      %v347 = vpop.permute.xlu0 %346
      %348 = vrot.lane.b32.xlu0 %v273, 4
      %v349 = vpop.permute.xlu0 %348
      %350 = vrot.lane.b32.xlu0 %v274, 4
      %v351 = vpop.permute.xlu0 %350
      %352 = vrot.lane.b32.xlu0 %v275, 4
      %v353 = vpop.permute.xlu0 %352
      %354 = vrot.lane.b32.xlu0 %v276, 4
      %v355 = vpop.permute.xlu0 %354
      %356 = vrot.lane.b32.xlu0 %v277, 4
      %v357 = vpop.permute.xlu0 %356
      %358 = vrot.lane.b32.xlu0 %v278, 4
      %v359 = vpop.permute.xlu0 %358
      %360 = vrot.lane.b32.xlu0 %v279, 4
      %v361 = vpop.permute.xlu0 %360
      %362 = vrot.lane.b32.xlu0 %v280, 4
      %v363 = vpop.permute.xlu0 %362
      %364 = vrot.lane.b32.xlu0 %v281, 4
      %v365 = vpop.permute.xlu0 %364
      %366 = vrot.lane.b32.xlu0 %v282, 4
      %v367 = vpop.permute.xlu0 %366
      %397 = vrot.lane.b32.xlu0 %v258, 8
      %v398 = vpop.permute.xlu0 %397
      %399 = vrot.lane.b32.xlu0 %v259, 8
      %v400 = vpop.permute.xlu0 %399
      %401 = vrot.lane.b32.xlu0 %v260, 8
      %v402 = vpop.permute.xlu0 %401
      %403 = vrot.lane.b32.xlu0 %v261, 8
      %v404 = vpop.permute.xlu0 %403
      %405 = vrot.lane.b32.xlu0 %v262, 8
      %v406 = vpop.permute.xlu0 %405
      %407 = vrot.lane.b32.xlu0 %v263, 8
      %v408 = vpop.permute.xlu0 %407
      %409 = vrot.lane.b32.xlu0 %v264, 8
      %v410 = vpop.permute.xlu0 %409
      %411 = vrot.lane.b32.xlu0 %v265, 8
      %v412 = vpop.permute.xlu0 %411
      %413 = vrot.lane.b32.xlu0 %v266, 8
      %v414 = vpop.permute.xlu0 %413
      %415 = vrot.lane.b32.xlu0 %v267, 8
      %v416 = vpop.permute.xlu0 %415
      %417 = vrot.lane.b32.xlu0 %v268, 8
      %v418 = vpop.permute.xlu0 %417
      %419 = vrot.lane.b32.xlu0 %v269, 8
      %v420 = vpop.permute.xlu0 %419
      %421 = vrot.lane.b32.xlu0 %v270, 8
      %v422 = vpop.permute.xlu0 %421
      %423 = vrot.lane.b32.xlu0 %v271, 8
      %v424 = vpop.permute.xlu0 %423
      %425 = vrot.lane.b32.xlu0 %v272, 8
      %v426 = vpop.permute.xlu0 %425
      %427 = vrot.lane.b32.xlu0 %v273, 8
      %v428 = vpop.permute.xlu0 %427
      %429 = vrot.lane.b32.xlu0 %v274, 8
      %v430 = vpop.permute.xlu0 %429
      %431 = vrot.lane.b32.xlu0 %v275, 8
      %v432 = vpop.permute.xlu0 %431
      %433 = vrot.lane.b32.xlu0 %v276, 8
      %v434 = vpop.permute.xlu0 %433
      %435 = vrot.lane.b32.xlu0 %v277, 8
      %v436 = vpop.permute.xlu0 %435
      %437 = vrot.lane.b32.xlu0 %v278, 8
      %v438 = vpop.permute.xlu0 %437
      %439 = vrot.lane.b32.xlu0 %v279, 8
      %v440 = vpop.permute.xlu0 %439
      %441 = vrot.lane.b32.xlu0 %v280, 8
      %v442 = vpop.permute.xlu0 %441
      %443 = vrot.lane.b32.xlu0 %v281, 8
      %v444 = vpop.permute.xlu0 %443
      %445 = vrot.lane.b32.xlu0 %v282, 8
      %v446 = vpop.permute.xlu0 %445
      %447 = vrot.lane.b32.xlu0 %v283, 8
      %v448 = vpop.permute.xlu0 %447
      %449 = vrot.lane.b32.xlu0 %v284, 8
      %v450 = vpop.permute.xlu0 %449
      %vm480 = vcmask 1046528
      %v481 = vrot.slane %v254, 1
      %v482 = vrot.slane %v255, 1
      %v483 = vsel %vm480, %v481, %v482
      %v484 = vrot.slane %v256, 1
      %v485 = vsel %vm480, %v482, %v484
      %v486 = vrot.slane %v257, 1
      %v487 = vsel %vm480, %v484, %v486
      %v488 = vrot.slane %v258, 1
      %v489 = vsel %vm480, %v486, %v488
      %v490 = vrot.slane %v259, 1
      %v491 = vsel %vm480, %v488, %v490
      %v492 = vrot.slane %v260, 1
      %v493 = vsel %vm480, %v490, %v492
      %v494 = vrot.slane %v261, 1
      %v495 = vsel %vm480, %v492, %v494
      %v496 = vrot.slane %v262, 1
      %v497 = vsel %vm480, %v494, %v496
      %v498 = vrot.slane %v263, 1
      %v499 = vsel %vm480, %v496, %v498
      %v500 = vrot.slane %v264, 1
      %v501 = vsel %vm480, %v498, %v500
      %v502 = vrot.slane %v265, 1
      %v503 = vsel %vm480, %v500, %v502
      %v504 = vrot.slane %v266, 1
      %v505 = vsel %vm480, %v502, %v504
      %v506 = vrot.slane %v267, 1
      %v507 = vsel %vm480, %v504, %v506
      %v508 = vrot.slane %v268, 1
      %v509 = vsel %vm480, %v506, %v508
      %v510 = vrot.slane %v269, 1
      %v511 = vsel %vm480, %v508, %v510
      %v512 = vrot.slane %v270, 1
      %v513 = vsel %vm480, %v510, %v512
      %v514 = vrot.slane %v271, 1
      %v515 = vsel %vm480, %v512, %v514
      %v516 = vrot.slane %v272, 1
      %v517 = vsel %vm480, %v514, %v516
      %v518 = vrot.slane %v273, 1
      %v519 = vsel %vm480, %v516, %v518
      %v520 = vrot.slane %v274, 1
      %v521 = vsel %vm480, %v518, %v520
      %v522 = vrot.slane %v275, 1
      %v523 = vsel %vm480, %v520, %v522
      %v524 = vrot.slane %v276, 1
      %v525 = vsel %vm480, %v522, %v524
      %v526 = vrot.slane %v277, 1
      %v527 = vsel %vm480, %v524, %v526
      %v528 = vrot.slane %v278, 1
      %v529 = vsel %vm480, %v526, %v528
      %v530 = vrot.slane %v279, 1
      %v531 = vsel %vm480, %v528, %v530
      %v532 = vrot.slane %v280, 1
      %v533 = vsel %vm480, %v530, %v532
      %v534 = vrot.slane %v281, 1
      %v535 = vsel %vm480, %v532, %v534
      %536 = vrot.lane.b32.xlu0 %v483, 12
      %v537 = vpop.permute.xlu0 %536
      %538 = vrot.lane.b32.xlu0 %v485, 12
      %v539 = vpop.permute.xlu0 %538
      %540 = vrot.lane.b32.xlu0 %v487, 12
      %v541 = vpop.permute.xlu0 %540
      %542 = vrot.lane.b32.xlu0 %v489, 12
      %v543 = vpop.permute.xlu0 %542
      %544 = vrot.lane.b32.xlu0 %v491, 12
      %v545 = vpop.permute.xlu0 %544
      %546 = vrot.lane.b32.xlu0 %v493, 12
      %v547 = vpop.permute.xlu0 %546
      %548 = vrot.lane.b32.xlu0 %v495, 12
      %v549 = vpop.permute.xlu0 %548
      %550 = vrot.lane.b32.xlu0 %v497, 12
      %v551 = vpop.permute.xlu0 %550
      %552 = vrot.lane.b32.xlu0 %v499, 12
      %v553 = vpop.permute.xlu0 %552
      %554 = vrot.lane.b32.xlu0 %v501, 12
      %v555 = vpop.permute.xlu0 %554
      %556 = vrot.lane.b32.xlu0 %v503, 12
      %v557 = vpop.permute.xlu0 %556
      %558 = vrot.lane.b32.xlu0 %v505, 12
      %v559 = vpop.permute.xlu0 %558
      %560 = vrot.lane.b32.xlu0 %v507, 12
      %v561 = vpop.permute.xlu0 %560
      %562 = vrot.lane.b32.xlu0 %v509, 12
      %v563 = vpop.permute.xlu0 %562
      %564 = vrot.lane.b32.xlu0 %v511, 12
      %v565 = vpop.permute.xlu0 %564
      %566 = vrot.lane.b32.xlu0 %v513, 12
      %v567 = vpop.permute.xlu0 %566
      %568 = vrot.lane.b32.xlu0 %v515, 12
      %v569 = vpop.permute.xlu0 %568
      %570 = vrot.lane.b32.xlu0 %v517, 12
      %v571 = vpop.permute.xlu0 %570
      %572 = vrot.lane.b32.xlu0 %v519, 12
      %v573 = vpop.permute.xlu0 %572
      %574 = vrot.lane.b32.xlu0 %v521, 12
      %v575 = vpop.permute.xlu0 %574
      %576 = vrot.lane.b32.xlu0 %v523, 12
      %v577 = vpop.permute.xlu0 %576
      %578 = vrot.lane.b32.xlu0 %v525, 12
      %v579 = vpop.permute.xlu0 %578
      %580 = vrot.lane.b32.xlu0 %v527, 12
      %v581 = vpop.permute.xlu0 %580
      %582 = vrot.lane.b32.xlu0 %v529, 12
      %v583 = vpop.permute.xlu0 %582
      %584 = vrot.lane.b32.xlu0 %v531, 12
      %v585 = vpop.permute.xlu0 %584
      %586 = vrot.lane.b32.xlu0 %v533, 12
      %v587 = vpop.permute.xlu0 %586
      %588 = vrot.lane.b32.xlu0 %v535, 12
      %v589 = vpop.permute.xlu0 %588
      %v617 = vrot.slane %v282, 1
      %v618 = vsel %vm480, %v534, %v617
      %v619 = vrot.slane %v283, 1
      %v620 = vsel %vm480, %v617, %v619
      %621 = vrot.lane.b32.xlu0 %v487, 16
      %v622 = vpop.permute.xlu0 %621
      %623 = vrot.lane.b32.xlu0 %v489, 16
      %v624 = vpop.permute.xlu0 %623
      %625 = vrot.lane.b32.xlu0 %v491, 16
      %v626 = vpop.permute.xlu0 %625
      %627 = vrot.lane.b32.xlu0 %v493, 16
      %v628 = vpop.permute.xlu0 %627
      %629 = vrot.lane.b32.xlu0 %v495, 16
      %v630 = vpop.permute.xlu0 %629
      %631 = vrot.lane.b32.xlu0 %v497, 16
      %v632 = vpop.permute.xlu0 %631
      %633 = vrot.lane.b32.xlu0 %v499, 16
      %v634 = vpop.permute.xlu0 %633
      %635 = vrot.lane.b32.xlu0 %v501, 16
      %v636 = vpop.permute.xlu0 %635
      %637 = vrot.lane.b32.xlu0 %v503, 16
      %v638 = vpop.permute.xlu0 %637
      %639 = vrot.lane.b32.xlu0 %v505, 16
      %v640 = vpop.permute.xlu0 %639
      %641 = vrot.lane.b32.xlu0 %v507, 16
      %v642 = vpop.permute.xlu0 %641
      %643 = vrot.lane.b32.xlu0 %v509, 16
      %v644 = vpop.permute.xlu0 %643
      %645 = vrot.lane.b32.xlu0 %v511, 16
      %v646 = vpop.permute.xlu0 %645
      %647 = vrot.lane.b32.xlu0 %v513, 16
      %v648 = vpop.permute.xlu0 %647
      %649 = vrot.lane.b32.xlu0 %v515, 16
      %v650 = vpop.permute.xlu0 %649
      %651 = vrot.lane.b32.xlu0 %v517, 16
      %v652 = vpop.permute.xlu0 %651
      %653 = vrot.lane.b32.xlu0 %v519, 16
      %v654 = vpop.permute.xlu0 %653
      %655 = vrot.lane.b32.xlu0 %v521, 16
      %v656 = vpop.permute.xlu0 %655
      %657 = vrot.lane.b32.xlu0 %v523, 16
      %v658 = vpop.permute.xlu0 %657
      %659 = vrot.lane.b32.xlu0 %v525, 16
      %v660 = vpop.permute.xlu0 %659
      %661 = vrot.lane.b32.xlu0 %v527, 16
      %v662 = vpop.permute.xlu0 %661
      %663 = vrot.lane.b32.xlu0 %v529, 16
      %v664 = vpop.permute.xlu0 %663
      %665 = vrot.lane.b32.xlu0 %v531, 16
      %v666 = vpop.permute.xlu0 %665
      %667 = vrot.lane.b32.xlu0 %v533, 16
      %v668 = vpop.permute.xlu0 %667
      %669 = vrot.lane.b32.xlu0 %v535, 16
      %v670 = vpop.permute.xlu0 %669
      %671 = vrot.lane.b32.xlu0 %v618, 16
      %v672 = vpop.permute.xlu0 %671
      %673 = vrot.lane.b32.xlu0 %v620, 16
      %v674 = vpop.permute.xlu0 %673
      %v703 = vrot.slane %v284, 1
      %v704 = vsel %vm480, %v619, %v703
      %v705 = vrot.slane %v285, 1
      %v706 = vsel %vm480, %v703, %v705
      %707 = vrot.lane.b32.xlu0 %v491, 20
      %v708 = vpop.permute.xlu0 %707
      %709 = vrot.lane.b32.xlu0 %v493, 20
      %v710 = vpop.permute.xlu0 %709
      %711 = vrot.lane.b32.xlu0 %v495, 20
      %v712 = vpop.permute.xlu0 %711
      %713 = vrot.lane.b32.xlu0 %v497, 20
      %v714 = vpop.permute.xlu0 %713
      %715 = vrot.lane.b32.xlu0 %v499, 20
      %v716 = vpop.permute.xlu0 %715
      %717 = vrot.lane.b32.xlu0 %v501, 20
      %v718 = vpop.permute.xlu0 %717
      %719 = vrot.lane.b32.xlu0 %v503, 20
      %v720 = vpop.permute.xlu0 %719
      %721 = vrot.lane.b32.xlu0 %v505, 20
      %v722 = vpop.permute.xlu0 %721
      %723 = vrot.lane.b32.xlu0 %v507, 20
      %v724 = vpop.permute.xlu0 %723
      %725 = vrot.lane.b32.xlu0 %v509, 20
      %v726 = vpop.permute.xlu0 %725
      %727 = vrot.lane.b32.xlu0 %v511, 20
      %v728 = vpop.permute.xlu0 %727
      %729 = vrot.lane.b32.xlu0 %v513, 20
      %v730 = vpop.permute.xlu0 %729
      %731 = vrot.lane.b32.xlu0 %v515, 20
      %v732 = vpop.permute.xlu0 %731
      %733 = vrot.lane.b32.xlu0 %v517, 20
      %v734 = vpop.permute.xlu0 %733
      %735 = vrot.lane.b32.xlu0 %v519, 20
      %v736 = vpop.permute.xlu0 %735
      %737 = vrot.lane.b32.xlu0 %v521, 20
      %v738 = vpop.permute.xlu0 %737
      %739 = vrot.lane.b32.xlu0 %v523, 20
      %v740 = vpop.permute.xlu0 %739
      %741 = vrot.lane.b32.xlu0 %v525, 20
      %v742 = vpop.permute.xlu0 %741
      %743 = vrot.lane.b32.xlu0 %v527, 20
      %v744 = vpop.permute.xlu0 %743
      %745 = vrot.lane.b32.xlu0 %v529, 20
      %v746 = vpop.permute.xlu0 %745
      %747 = vrot.lane.b32.xlu0 %v531, 20
      %v748 = vpop.permute.xlu0 %747
      %749 = vrot.lane.b32.xlu0 %v533, 20
      %v750 = vpop.permute.xlu0 %749
      %751 = vrot.lane.b32.xlu0 %v535, 20
      %v752 = vpop.permute.xlu0 %751
      %753 = vrot.lane.b32.xlu0 %v618, 20
      %v754 = vpop.permute.xlu0 %753
      %755 = vrot.lane.b32.xlu0 %v620, 20
      %v756 = vpop.permute.xlu0 %755
      %757 = vrot.lane.b32.xlu0 %v704, 20
      %v758 = vpop.permute.xlu0 %757
      %759 = vrot.lane.b32.xlu0 %v706, 20
      %v760 = vpop.permute.xlu0 %759
      %vm788 = vcmask 1045504
      %v789 = vrot.slane %v254, 2
      %v790 = vrot.slane %v255, 2
      %v791 = vsel %vm788, %v789, %v790
      %v792 = vrot.slane %v256, 2
      %v793 = vsel %vm788, %v790, %v792
      %v794 = vrot.slane %v257, 2
      %v795 = vsel %vm788, %v792, %v794
      %v796 = vrot.slane %v258, 2
      %v797 = vsel %vm788, %v794, %v796
      %v798 = vrot.slane %v259, 2
      %v799 = vsel %vm788, %v796, %v798
      %v800 = vrot.slane %v260, 2
      %v801 = vsel %vm788, %v798, %v800
      %v802 = vrot.slane %v261, 2
      %v803 = vsel %vm788, %v800, %v802
      %v804 = vrot.slane %v262, 2
      %v805 = vsel %vm788, %v802, %v804
      %v806 = vrot.slane %v263, 2
      %v807 = vsel %vm788, %v804, %v806
      %v808 = vrot.slane %v264, 2
      %v809 = vsel %vm788, %v806, %v808
      %v810 = vrot.slane %v265, 2
      %v811 = vsel %vm788, %v808, %v810
      %v812 = vrot.slane %v266, 2
      %v813 = vsel %vm788, %v810, %v812
      %v814 = vrot.slane %v267, 2
      %v815 = vsel %vm788, %v812, %v814
      %v816 = vrot.slane %v268, 2
      %v817 = vsel %vm788, %v814, %v816
      %v818 = vrot.slane %v269, 2
      %v819 = vsel %vm788, %v816, %v818
      %v820 = vrot.slane %v270, 2
      %v821 = vsel %vm788, %v818, %v820
      %v822 = vrot.slane %v271, 2
      %v823 = vsel %vm788, %v820, %v822
      %v824 = vrot.slane %v272, 2
      %v825 = vsel %vm788, %v822, %v824
      %v826 = vrot.slane %v273, 2
      %v827 = vsel %vm788, %v824, %v826
      %v828 = vrot.slane %v274, 2
      %v829 = vsel %vm788, %v826, %v828
      %v830 = vrot.slane %v275, 2
      %v831 = vsel %vm788, %v828, %v830
      %v832 = vrot.slane %v276, 2
      %v833 = vsel %vm788, %v830, %v832
      %v834 = vrot.slane %v277, 2
      %v835 = vsel %vm788, %v832, %v834
      %v836 = vrot.slane %v278, 2
      %v837 = vsel %vm788, %v834, %v836
      %v838 = vrot.slane %v279, 2
      %v839 = vsel %vm788, %v836, %v838
      %v840 = vrot.slane %v280, 2
      %v841 = vsel %vm788, %v838, %v840
      %v842 = vrot.slane %v281, 2
      %v843 = vsel %vm788, %v840, %v842
      %844 = vrot.lane.b32.xlu0 %v791, 24
      %v845 = vpop.permute.xlu0 %844
      %846 = vrot.lane.b32.xlu0 %v793, 24
      %v847 = vpop.permute.xlu0 %846
      %848 = vrot.lane.b32.xlu0 %v795, 24
      %v849 = vpop.permute.xlu0 %848
      %850 = vrot.lane.b32.xlu0 %v797, 24
      %v851 = vpop.permute.xlu0 %850
      %852 = vrot.lane.b32.xlu0 %v799, 24
      %v853 = vpop.permute.xlu0 %852
      %854 = vrot.lane.b32.xlu0 %v801, 24
      %v855 = vpop.permute.xlu0 %854
      %856 = vrot.lane.b32.xlu0 %v803, 24
      %v857 = vpop.permute.xlu0 %856
      %858 = vrot.lane.b32.xlu0 %v805, 24
      %v859 = vpop.permute.xlu0 %858
      %860 = vrot.lane.b32.xlu0 %v807, 24
      %v861 = vpop.permute.xlu0 %860
      %862 = vrot.lane.b32.xlu0 %v809, 24
      %v863 = vpop.permute.xlu0 %862
      %864 = vrot.lane.b32.xlu0 %v811, 24
      %v865 = vpop.permute.xlu0 %864
      %866 = vrot.lane.b32.xlu0 %v813, 24
      %v867 = vpop.permute.xlu0 %866
      %868 = vrot.lane.b32.xlu0 %v815, 24
      %v869 = vpop.permute.xlu0 %868
      %870 = vrot.lane.b32.xlu0 %v817, 24
      %v871 = vpop.permute.xlu0 %870
      %872 = vrot.lane.b32.xlu0 %v819, 24
      %v873 = vpop.permute.xlu0 %872
      %874 = vrot.lane.b32.xlu0 %v821, 24
      %v875 = vpop.permute.xlu0 %874
      %876 = vrot.lane.b32.xlu0 %v823, 24
      %v877 = vpop.permute.xlu0 %876
      %878 = vrot.lane.b32.xlu0 %v825, 24
      %v879 = vpop.permute.xlu0 %878
      %880 = vrot.lane.b32.xlu0 %v827, 24
      %v881 = vpop.permute.xlu0 %880
      %882 = vrot.lane.b32.xlu0 %v829, 24
      %v883 = vpop.permute.xlu0 %882
      %884 = vrot.lane.b32.xlu0 %v831, 24
      %v885 = vpop.permute.xlu0 %884
      %886 = vrot.lane.b32.xlu0 %v833, 24
      %v887 = vpop.permute.xlu0 %886
      %888 = vrot.lane.b32.xlu0 %v835, 24
      %v889 = vpop.permute.xlu0 %888
      %890 = vrot.lane.b32.xlu0 %v837, 24
      %v891 = vpop.permute.xlu0 %890
      %892 = vrot.lane.b32.xlu0 %v839, 24
      %v893 = vpop.permute.xlu0 %892
      %894 = vrot.lane.b32.xlu0 %v841, 24
      %v895 = vpop.permute.xlu0 %894
      %896 = vrot.lane.b32.xlu0 %v843, 24
      %v897 = vpop.permute.xlu0 %896
      %v925 = vrot.slane %v282, 2
      %v926 = vsel %vm788, %v842, %v925
      %v927 = vrot.slane %v283, 2
      %v928 = vsel %vm788, %v925, %v927
      %929 = vrot.lane.b32.xlu0 %v795, 28
      %v930 = vpop.permute.xlu0 %929
      %931 = vrot.lane.b32.xlu0 %v797, 28
      %v932 = vpop.permute.xlu0 %931
      %933 = vrot.lane.b32.xlu0 %v799, 28
      %v934 = vpop.permute.xlu0 %933
      %935 = vrot.lane.b32.xlu0 %v801, 28
      %v936 = vpop.permute.xlu0 %935
      %937 = vrot.lane.b32.xlu0 %v803, 28
      %v938 = vpop.permute.xlu0 %937
      %939 = vrot.lane.b32.xlu0 %v805, 28
      %v940 = vpop.permute.xlu0 %939
      %941 = vrot.lane.b32.xlu0 %v807, 28
      %v942 = vpop.permute.xlu0 %941
      %943 = vrot.lane.b32.xlu0 %v809, 28
      %v944 = vpop.permute.xlu0 %943
      %945 = vrot.lane.b32.xlu0 %v811, 28
      %v946 = vpop.permute.xlu0 %945
      %947 = vrot.lane.b32.xlu0 %v813, 28
      %v948 = vpop.permute.xlu0 %947
      %949 = vrot.lane.b32.xlu0 %v815, 28
      %v950 = vpop.permute.xlu0 %949
      %951 = vrot.lane.b32.xlu0 %v817, 28
      %v952 = vpop.permute.xlu0 %951
      %953 = vrot.lane.b32.xlu0 %v819, 28
      %v954 = vpop.permute.xlu0 %953
      %955 = vrot.lane.b32.xlu0 %v821, 28
      %v956 = vpop.permute.xlu0 %955
      %957 = vrot.lane.b32.xlu0 %v823, 28
      %v958 = vpop.permute.xlu0 %957
      %959 = vrot.lane.b32.xlu0 %v825, 28
      %v960 = vpop.permute.xlu0 %959
      %961 = vrot.lane.b32.xlu0 %v827, 28
      %v962 = vpop.permute.xlu0 %961
      %963 = vrot.lane.b32.xlu0 %v829, 28
      %v964 = vpop.permute.xlu0 %963
      %965 = vrot.lane.b32.xlu0 %v831, 28
      %v966 = vpop.permute.xlu0 %965
      %967 = vrot.lane.b32.xlu0 %v833, 28
      %v968 = vpop.permute.xlu0 %967
      %969 = vrot.lane.b32.xlu0 %v835, 28
      %v970 = vpop.permute.xlu0 %969
      %971 = vrot.lane.b32.xlu0 %v837, 28
      %v972 = vpop.permute.xlu0 %971
      %973 = vrot.lane.b32.xlu0 %v839, 28
      %v974 = vpop.permute.xlu0 %973
      %975 = vrot.lane.b32.xlu0 %v841, 28
      %v976 = vpop.permute.xlu0 %975
      %977 = vrot.lane.b32.xlu0 %v843, 28
      %v978 = vpop.permute.xlu0 %977
      %979 = vrot.lane.b32.xlu0 %v926, 28
      %v980 = vpop.permute.xlu0 %979
      %981 = vrot.lane.b32.xlu0 %v928, 28
      %v982 = vpop.permute.xlu0 %981
      %v1010 = vrot.slane %v284, 2
      %v1011 = vsel %vm788, %v927, %v1010
      %v1012 = vrot.slane %v285, 2
      %v1013 = vsel %vm788, %v1010, %v1012
      %1014 = vrot.lane.b32.xlu0 %v799, 32
      %v1015 = vpop.permute.xlu0 %1014
      %1016 = vrot.lane.b32.xlu0 %v801, 32
      %v1017 = vpop.permute.xlu0 %1016
      %1018 = vrot.lane.b32.xlu0 %v803, 32
      %v1019 = vpop.permute.xlu0 %1018
      %1020 = vrot.lane.b32.xlu0 %v805, 32
      %v1021 = vpop.permute.xlu0 %1020
      %1022 = vrot.lane.b32.xlu0 %v807, 32
      %v1023 = vpop.permute.xlu0 %1022
      %1024 = vrot.lane.b32.xlu0 %v809, 32
      %v1025 = vpop.permute.xlu0 %1024
      %1026 = vrot.lane.b32.xlu0 %v811, 32
      %v1027 = vpop.permute.xlu0 %1026
      %1028 = vrot.lane.b32.xlu0 %v813, 32
      %v1029 = vpop.permute.xlu0 %1028
      %1030 = vrot.lane.b32.xlu0 %v815, 32
      %v1031 = vpop.permute.xlu0 %1030
      %1032 = vrot.lane.b32.xlu0 %v817, 32
      %v1033 = vpop.permute.xlu0 %1032
      %1034 = vrot.lane.b32.xlu0 %v819, 32
      %v1035 = vpop.permute.xlu0 %1034
      %1036 = vrot.lane.b32.xlu0 %v821, 32
      %v1037 = vpop.permute.xlu0 %1036
      %1038 = vrot.lane.b32.xlu0 %v823, 32
      %v1039 = vpop.permute.xlu0 %1038
      %1040 = vrot.lane.b32.xlu0 %v825, 32
      %v1041 = vpop.permute.xlu0 %1040
      %1042 = vrot.lane.b32.xlu0 %v827, 32
      %v1043 = vpop.permute.xlu0 %1042
      %1044 = vrot.lane.b32.xlu0 %v829, 32
      %v1045 = vpop.permute.xlu0 %1044
      %1046 = vrot.lane.b32.xlu0 %v831, 32
      %v1047 = vpop.permute.xlu0 %1046
      %1048 = vrot.lane.b32.xlu0 %v833, 32
      %v1049 = vpop.permute.xlu0 %1048
      %1050 = vrot.lane.b32.xlu0 %v835, 32
      %v1051 = vpop.permute.xlu0 %1050
      %1052 = vrot.lane.b32.xlu0 %v837, 32
      %v1053 = vpop.permute.xlu0 %1052
      %1054 = vrot.lane.b32.xlu0 %v839, 32
      %v1055 = vpop.permute.xlu0 %1054
      %1056 = vrot.lane.b32.xlu0 %v841, 32
      %v1057 = vpop.permute.xlu0 %1056
      %1058 = vrot.lane.b32.xlu0 %v843, 32
      %v1059 = vpop.permute.xlu0 %1058
      %1060 = vrot.lane.b32.xlu0 %v926, 32
      %v1061 = vpop.permute.xlu0 %1060
      %1062 = vrot.lane.b32.xlu0 %v928, 32
      %v1063 = vpop.permute.xlu0 %1062
      %1064 = vrot.lane.b32.xlu0 %v1011, 32
      %v1065 = vpop.permute.xlu0 %1064
      %1066 = vrot.lane.b32.xlu0 %v1013, 32
      %v1067 = vpop.permute.xlu0 %1066
      %vm1095 = vcmask 31744
      %v1096 = vsel %vm1095, %v254, %v315
      %v1097 = vsel %vm1095, %v255, %v317
      %v1098 = vsel %vm1095, %v256, %v319
      %v1099 = vsel %vm1095, %v257, %v321
      %v1100 = vsel %vm1095, %v258, %v323
      %v1101 = vsel %vm1095, %v259, %v325
      %v1102 = vsel %vm1095, %v260, %v327
      %v1103 = vsel %vm1095, %v261, %v329
      %v1104 = vsel %vm1095, %v262, %v331
      %v1105 = vsel %vm1095, %v263, %v333
      %v1106 = vsel %vm1095, %v264, %v335
      %v1107 = vsel %vm1095, %v265, %v337
      %v1108 = vsel %vm1095, %v266, %v339
      %v1109 = vsel %vm1095, %v267, %v341
      %v1110 = vsel %vm1095, %v268, %v343
      %v1111 = vsel %vm1095, %v269, %v345
      %v1112 = vsel %vm1095, %v270, %v347
      %v1113 = vsel %vm1095, %v271, %v349
      %v1114 = vsel %vm1095, %v272, %v351
      %v1115 = vsel %vm1095, %v273, %v353
      %v1116 = vsel %vm1095, %v274, %v355
      %v1117 = vsel %vm1095, %v275, %v357
      %v1118 = vsel %vm1095, %v276, %v359
      %v1119 = vsel %vm1095, %v277, %v361
      %v1120 = vsel %vm1095, %v278, %v363
      %v1121 = vsel %vm1095, %v279, %v365
      %v1122 = vsel %vm1095, %v280, %v367
      %vm1123 = vcmask 64512
      %v1124 = vsel %vm1123, %v1096, %v398
      %v1125 = vsel %vm1123, %v1097, %v400
      %v1126 = vsel %vm1123, %v1098, %v402
      %v1127 = vsel %vm1123, %v1099, %v404
      %v1128 = vsel %vm1123, %v1100, %v406
      %v1129 = vsel %vm1123, %v1101, %v408
      %v1130 = vsel %vm1123, %v1102, %v410
      %v1131 = vsel %vm1123, %v1103, %v412
      %v1132 = vsel %vm1123, %v1104, %v414
      %v1133 = vsel %vm1123, %v1105, %v416
      %v1134 = vsel %vm1123, %v1106, %v418
      %v1135 = vsel %vm1123, %v1107, %v420
      %v1136 = vsel %vm1123, %v1108, %v422
      %v1137 = vsel %vm1123, %v1109, %v424
      %v1138 = vsel %vm1123, %v1110, %v426
      %v1139 = vsel %vm1123, %v1111, %v428
      %v1140 = vsel %vm1123, %v1112, %v430
      %v1141 = vsel %vm1123, %v1113, %v432
      %v1142 = vsel %vm1123, %v1114, %v434
      %v1143 = vsel %vm1123, %v1115, %v436
      %v1144 = vsel %vm1123, %v1116, %v438
      %v1145 = vsel %vm1123, %v1117, %v440
      %v1146 = vsel %vm1123, %v1118, %v442
      %v1147 = vsel %vm1123, %v1119, %v444
      %v1148 = vsel %vm1123, %v1120, %v446
      %v1149 = vsel %vm1123, %v1121, %v448
      %v1150 = vsel %vm1123, %v1122, %v450
      %vm1151 = vcmask 97280
      %v1152 = vsel %vm1151, %v1124, %v537
      %v1153 = vsel %vm1151, %v1125, %v539
      %v1154 = vsel %vm1151, %v1126, %v541
      %v1155 = vsel %vm1151, %v1127, %v543
      %v1156 = vsel %vm1151, %v1128, %v545
      %v1157 = vsel %vm1151, %v1129, %v547
      %v1158 = vsel %vm1151, %v1130, %v549
      %v1159 = vsel %vm1151, %v1131, %v551
      %v1160 = vsel %vm1151, %v1132, %v553
      %v1161 = vsel %vm1151, %v1133, %v555
      %v1162 = vsel %vm1151, %v1134, %v557
      %v1163 = vsel %vm1151, %v1135, %v559
      %v1164 = vsel %vm1151, %v1136, %v561
      %v1165 = vsel %vm1151, %v1137, %v563
      %v1166 = vsel %vm1151, %v1138, %v565
      %v1167 = vsel %vm1151, %v1139, %v567
      %v1168 = vsel %vm1151, %v1140, %v569
      %v1169 = vsel %vm1151, %v1141, %v571
      %v1170 = vsel %vm1151, %v1142, %v573
      %v1171 = vsel %vm1151, %v1143, %v575
      %v1172 = vsel %vm1151, %v1144, %v577
      %v1173 = vsel %vm1151, %v1145, %v579
      %v1174 = vsel %vm1151, %v1146, %v581
      %v1175 = vsel %vm1151, %v1147, %v583
      %v1176 = vsel %vm1151, %v1148, %v585
      %v1177 = vsel %vm1151, %v1149, %v587
      %v1178 = vsel %vm1151, %v1150, %v589
      %vm1179 = vcmask 130048
      %v1180 = vsel %vm1179, %v1152, %v622
      %v1181 = vsel %vm1179, %v1153, %v624
      %v1182 = vsel %vm1179, %v1154, %v626
      %v1183 = vsel %vm1179, %v1155, %v628
      %v1184 = vsel %vm1179, %v1156, %v630
      %v1185 = vsel %vm1179, %v1157, %v632
      %v1186 = vsel %vm1179, %v1158, %v634
      %v1187 = vsel %vm1179, %v1159, %v636
      %v1188 = vsel %vm1179, %v1160, %v638
      %v1189 = vsel %vm1179, %v1161, %v640
      %v1190 = vsel %vm1179, %v1162, %v642
      %v1191 = vsel %vm1179, %v1163, %v644
      %v1192 = vsel %vm1179, %v1164, %v646
      %v1193 = vsel %vm1179, %v1165, %v648
      %v1194 = vsel %vm1179, %v1166, %v650
      %v1195 = vsel %vm1179, %v1167, %v652
      %v1196 = vsel %vm1179, %v1168, %v654
      %v1197 = vsel %vm1179, %v1169, %v656
      %v1198 = vsel %vm1179, %v1170, %v658
      %v1199 = vsel %vm1179, %v1171, %v660
      %v1200 = vsel %vm1179, %v1172, %v662
      %v1201 = vsel %vm1179, %v1173, %v664
      %v1202 = vsel %vm1179, %v1174, %v666
      %v1203 = vsel %vm1179, %v1175, %v668
      %v1204 = vsel %vm1179, %v1176, %v670
      %v1205 = vsel %vm1179, %v1177, %v672
      %v1206 = vsel %vm1179, %v1178, %v674
      %vm1207 = vcmask 162816
      %v1208 = vsel %vm1207, %v1180, %v708
      %v1209 = vsel %vm1207, %v1181, %v710
      %v1210 = vsel %vm1207, %v1182, %v712
      %v1211 = vsel %vm1207, %v1183, %v714
      %v1212 = vsel %vm1207, %v1184, %v716
      %v1213 = vsel %vm1207, %v1185, %v718
      %v1214 = vsel %vm1207, %v1186, %v720
      %v1215 = vsel %vm1207, %v1187, %v722
      %v1216 = vsel %vm1207, %v1188, %v724
      %v1217 = vsel %vm1207, %v1189, %v726
      %v1218 = vsel %vm1207, %v1190, %v728
      %v1219 = vsel %vm1207, %v1191, %v730
      %v1220 = vsel %vm1207, %v1192, %v732
      %v1221 = vsel %vm1207, %v1193, %v734
      %v1222 = vsel %vm1207, %v1194, %v736
      %v1223 = vsel %vm1207, %v1195, %v738
      %v1224 = vsel %vm1207, %v1196, %v740
      %v1225 = vsel %vm1207, %v1197, %v742
      %v1226 = vsel %vm1207, %v1198, %v744
      %v1227 = vsel %vm1207, %v1199, %v746
      %v1228 = vsel %vm1207, %v1200, %v748
      %v1229 = vsel %vm1207, %v1201, %v750
      %v1230 = vsel %vm1207, %v1202, %v752
      %v1231 = vsel %vm1207, %v1203, %v754
      %v1232 = vsel %vm1207, %v1204, %v756
      %v1233 = vsel %vm1207, %v1205, %v758
      %v1234 = vsel %vm1207, %v1206, %v760
      %vm1235 = vcmask 195584
      %v1236 = vsel %vm1235, %v1208, %v845
      %v1237 = vsel %vm1235, %v1209, %v847
      %v1238 = vsel %vm1235, %v1210, %v849
      %v1239 = vsel %vm1235, %v1211, %v851
      %v1240 = vsel %vm1235, %v1212, %v853
      %v1241 = vsel %vm1235, %v1213, %v855
      %v1242 = vsel %vm1235, %v1214, %v857
      %v1243 = vsel %vm1235, %v1215, %v859
      %v1244 = vsel %vm1235, %v1216, %v861
      %v1245 = vsel %vm1235, %v1217, %v863
      %v1246 = vsel %vm1235, %v1218, %v865
      %v1247 = vsel %vm1235, %v1219, %v867
      %v1248 = vsel %vm1235, %v1220, %v869
      %v1249 = vsel %vm1235, %v1221, %v871
      %v1250 = vsel %vm1235, %v1222, %v873
      %v1251 = vsel %vm1235, %v1223, %v875
      %v1252 = vsel %vm1235, %v1224, %v877
      %v1253 = vsel %vm1235, %v1225, %v879
      %v1254 = vsel %vm1235, %v1226, %v881
      %v1255 = vsel %vm1235, %v1227, %v883
      %v1256 = vsel %vm1235, %v1228, %v885
      %v1257 = vsel %vm1235, %v1229, %v887
      %v1258 = vsel %vm1235, %v1230, %v889
      %v1259 = vsel %vm1235, %v1231, %v891
      %v1260 = vsel %vm1235, %v1232, %v893
      %v1261 = vsel %vm1235, %v1233, %v895
      %v1262 = vsel %vm1235, %v1234, %v897
      %vm1263 = vcmask 228352
      %v1264 = vsel %vm1263, %v1236, %v930
      %v1265 = vsel %vm1263, %v1237, %v932
      %v1266 = vsel %vm1263, %v1238, %v934
      %v1267 = vsel %vm1263, %v1239, %v936
      %v1268 = vsel %vm1263, %v1240, %v938
      %v1269 = vsel %vm1263, %v1241, %v940
      %v1270 = vsel %vm1263, %v1242, %v942
      %v1271 = vsel %vm1263, %v1243, %v944
      %v1272 = vsel %vm1263, %v1244, %v946
      %v1273 = vsel %vm1263, %v1245, %v948
      %v1274 = vsel %vm1263, %v1246, %v950
      %v1275 = vsel %vm1263, %v1247, %v952
      %v1276 = vsel %vm1263, %v1248, %v954
      %v1277 = vsel %vm1263, %v1249, %v956
      %v1278 = vsel %vm1263, %v1250, %v958
      %v1279 = vsel %vm1263, %v1251, %v960
      %v1280 = vsel %vm1263, %v1252, %v962
      %v1281 = vsel %vm1263, %v1253, %v964
      %v1282 = vsel %vm1263, %v1254, %v966
      %v1283 = vsel %vm1263, %v1255, %v968
      %v1284 = vsel %vm1263, %v1256, %v970
      %v1285 = vsel %vm1263, %v1257, %v972
      %v1286 = vsel %vm1263, %v1258, %v974
      %v1287 = vsel %vm1263, %v1259, %v976
      %v1288 = vsel %vm1263, %v1260, %v978
      %v1289 = vsel %vm1263, %v1261, %v980
      %v1290 = vsel %vm1263, %v1262, %v982
      %vm1291 = vcmask 261120
      %v1292 = vsel %vm1291, %v1264, %v1015
      %v1293 = vsel %vm1291, %v1265, %v1017
      %v1294 = vsel %vm1291, %v1266, %v1019
      %v1295 = vsel %vm1291, %v1267, %v1021
      %v1296 = vsel %vm1291, %v1268, %v1023
      %v1297 = vsel %vm1291, %v1269, %v1025
      %v1298 = vsel %vm1291, %v1270, %v1027
      %v1299 = vsel %vm1291, %v1271, %v1029
      %v1300 = vsel %vm1291, %v1272, %v1031
      %v1301 = vsel %vm1291, %v1273, %v1033
      %v1302 = vsel %vm1291, %v1274, %v1035
      %v1303 = vsel %vm1291, %v1275, %v1037
      %v1304 = vsel %vm1291, %v1276, %v1039
      %v1305 = vsel %vm1291, %v1277, %v1041
      %v1306 = vsel %vm1291, %v1278, %v1043
      %v1307 = vsel %vm1291, %v1279, %v1045
      %v1308 = vsel %vm1291, %v1280, %v1047
      %v1309 = vsel %vm1291, %v1281, %v1049
      %v1310 = vsel %vm1291, %v1282, %v1051
      %v1311 = vsel %vm1291, %v1283, %v1053
      %v1312 = vsel %vm1291, %v1284, %v1055
      %v1313 = vsel %vm1291, %v1285, %v1057
      %v1314 = vsel %vm1291, %v1286, %v1059
      %v1315 = vsel %vm1291, %v1287, %v1061
      %v1316 = vsel %vm1291, %v1288, %v1063
      %v1317 = vsel %vm1291, %v1289, %v1065
      %v1318 = vsel %vm1291, %v1290, %v1067
      %v1319 = vld [vmem:[%s1] sm:$0xff]
      %v1320 = vld [vmem:[%s1 + $0x8] sm:$0xff]
      %v1321 = vld [vmem:[%s1 + $0x10] sm:$0xff]
      %v1322 = vld [vmem:[%s1 + $0x18] sm:$0xff]
      %v1323 = vld [vmem:[%s1 + $0x20] sm:$0xf]
      %v1325 = vlaneseq
      %v1326 = vshrl.u32 %v1325, 7
      %v1327 = vsub.s32 0, %v1326
      %v1328 = vrot.slane %v286, %v1327
      %vm1330 = vcmask 293888
      %v1332 = vsel %vm1330, %v1292, 0
      %v1335 = vsel %vm1330, %v1293, 0
      %v1338 = vsel %vm1330, %v1294, 0
      %v1341 = vsel %vm1330, %v1295, 0
      %v1344 = vsel %vm1330, %v1296, 0
      %v1347 = vsel %vm1330, %v1297, 0
      %v1350 = vsel %vm1330, %v1298, 0
      %v1353 = vsel %vm1330, %v1299, 0
      %v1356 = vsel %vm1330, %v1300, 0
      %v1359 = vsel %vm1330, %v1301, 0
      %v1362 = vsel %vm1330, %v1302, 0
      %v1365 = vsel %vm1330, %v1303, 0
      %v1368 = vsel %vm1330, %v1304, 0
      %v1371 = vsel %vm1330, %v1305, 0
      %v1374 = vsel %vm1330, %v1306, 0
      %v1377 = vsel %vm1330, %v1307, 0
      %v1380 = vsel %vm1330, %v1308, 0
      %v1383 = vsel %vm1330, %v1309, 0
      %v1386 = vsel %vm1330, %v1310, 0
      %v1389 = vsel %vm1330, %v1311, 0
      %v1392 = vsel %vm1330, %v1312, 0
      %v1395 = vsel %vm1330, %v1313, 0
      %v1398 = vsel %vm1330, %v1314, 0
      %v1401 = vsel %vm1330, %v1315, 0
      %v1404 = vsel %vm1330, %v1316, 0
      %v1407 = vsel %vm1330, %v1317, 0
      %v1410 = vsel %vm1330, %v1318, 0
      %vm1412 = vcmask 1043456
      %v1414 = vsel %vm1412, %v1323, 0
      %1416 = vmatprep.subr.mxu0 0.0
      %1417 = vmatpush1.msra.mxu0 %v1319
      %1418 = vmatprep.subr.mxu0 0.0
      %1419 = vmatpush1.msra.mxu0 %v1320
      %1420 = vmatprep.subr.mxu0 0.0
      %1421 = vmatpush1.msra.mxu0 %v1321
      %1422 = vmatprep.subr.mxu0 0.0
      %1423 = vmatpush1.msra.mxu0 %v1322
      %1424 = vmatprep.subr.mxu0 0.0
      %1425 = vmatpush1.msra.mxu0 %v1414
      %1426 = vmatprep.subr.mxu0 0.0
      %1427 = vmatpush1.msra.mxu0 0.0
      %1428 = vmatprep.subr.mxu0 0.0
      %1429 = vmatpush1.msra.mxu0 0.0
      %1430 = vmatprep.subr.mxu0 0.0
      %1431 = vmatpush1.msra.mxu0 0.0
      %1432 = vmatprep.subr.mxu0 0.0
      %1433 = vmatpush1.msra.mxu0 0.0
      %1434 = vmatprep.subr.mxu0 0.0
      %1435 = vmatpush1.msra.mxu0 0.0
      %1436 = vmatprep.subr.mxu0 0.0
      %1437 = vmatpush1.msra.mxu0 0.0
      %1438 = vmatprep.subr.mxu0 0.0
      %1439 = vmatpush1.msra.mxu0 0.0
      %1440 = vmatprep.subr.mxu0 0.0
      %1441 = vmatpush1.msra.mxu0 0.0
      %1442 = vmatprep.subr.mxu0 0.0
      %1443 = vmatpush1.msra.mxu0 0.0
      %1444 = vmatprep.subr.mxu0 0.0
      %1445 = vmatpush1.msra.mxu0 0.0
      %1446 = vmatprep.subr.mxu0 0.0
      %1447 = vmatpush1.msra.mxu0 0.0
      %1448 = vmatprep.subr.mxu0 0.0
      %1449 = vmatpush1.msra.mxu0 0.0
      %1450 = vmatprep.subr.mxu0 0.0
      %1451 = vmatpush1.msra.mxu0 0.0
      %1452 = vmatprep.subr.mxu0 0.0
      %1453 = vmatpush1.msra.mxu0 0.0
      %1454 = vmatprep.subr.mxu0 0.0
      %1455 = vmatpush1.msra.mxu0 0.0
      %1456 = vmatprep.subr.mxu0 0.0
      %1457 = vmatpush1.msra.mxu0 0.0
      %1458 = vmatprep.subr.mxu0 0.0
      %1459 = vmatpush1.msra.mxu0 0.0
      %1460 = vmatprep.subr.mxu0 0.0
      %1461 = vmatpush1.msra.mxu0 0.0
      %1462 = vmatprep.subr.mxu0 0.0
      %1463 = vmatpush1.msra.mxu0 0.0
      %1464 = vmatprep.subr.mxu0 0.0
      %1465 = vmatpush1.msra.mxu0 0.0
      %1466 = vmatprep.subr.mxu0 0.0
      %1467 = vmatpush1.msra.mxu0 0.0
      %1468 = vmatprep.subr.mxu0 0.0
      %1469 = vmatpush1.msra.mxu0 0.0
      %1470 = vmatprep.subr.mxu0 0.0
      %1471 = vmatpush1.msra.mxu0 0.0
      %1472 = vmatprep.subr.mxu0 0.0
      %1473 = vmatpush1.msra.mxu0 0.0
      %1474 = vmatprep.subr.mxu0 0.0
      %1475 = vmatpush1.msra.mxu0 0.0
      %1476 = vmatprep.subr.mxu0 0.0
      %1477 = vmatpush1.msra.mxu0 0.0
      %1478 = vmatprep.subr.mxu0 0.0
      %1479 = vmatpush1.msra.mxu0 0.0
      %1480 = vmatprep.mubr.f32.mxu0 0.0
      %1481 = vmatmul.mubr.f32.gmra.mrb[0].mxu0 %v1332
      %v1482 = vpop.f32.mrb[0].mxu0
      %v1483 = vadd.f32 %v1328, %v1482
      %v1484 = vpop.f32.mrb[0].mxu0
      %1485 = vmatprep.mubr.f32.mxu0 0.0
      %1486 = vmatmul.mubr.f32.gmra.mrb[0].mxu0 %v1335
      %v1487 = vpop.f32.mrb[0].mxu0
      %v1488 = vadd.f32 %v1328, %v1487
      %v1489 = vpop.f32.mrb[0].mxu0
      %1490 = vmatprep.mubr.f32.mxu0 0.0
      %1491 = vmatmul.mubr.f32.gmra.mrb[0].mxu0 %v1338
      %v1492 = vpop.f32.mrb[0].mxu0
      %v1493 = vadd.f32 %v1328, %v1492
      %v1494 = vpop.f32.mrb[0].mxu0
      %1495 = vmatprep.mubr.f32.mxu0 0.0
      %1496 = vmatmul.mubr.f32.gmra.mrb[0].mxu0 %v1341
      %v1497 = vpop.f32.mrb[0].mxu0
      %v1498 = vadd.f32 %v1328, %v1497
      %v1499 = vpop.f32.mrb[0].mxu0
      %1500 = vmatprep.mubr.f32.mxu0 0.0
      %1501 = vmatmul.mubr.f32.gmra.mrb[0].mxu0 %v1344
      %v1502 = vpop.f32.mrb[0].mxu0
      %v1503 = vadd.f32 %v1328, %v1502
      %v1504 = vpop.f32.mrb[0].mxu0
      %1505 = vmatprep.mubr.f32.mxu0 0.0
      %1506 = vmatmul.mubr.f32.gmra.mrb[0].mxu0 %v1347
      %v1507 = vpop.f32.mrb[0].mxu0
      %v1508 = vadd.f32 %v1328, %v1507
      %v1509 = vpop.f32.mrb[0].mxu0
      %1510 = vmatprep.mubr.f32.mxu0 0.0
      %1511 = vmatmul.mubr.f32.gmra.mrb[0].mxu0 %v1350
      %v1512 = vpop.f32.mrb[0].mxu0
      %v1513 = vadd.f32 %v1328, %v1512
      %v1514 = vpop.f32.mrb[0].mxu0
      %1515 = vmatprep.mubr.f32.mxu0 0.0
      %1516 = vmatmul.mubr.f32.gmra.mrb[0].mxu0 %v1353
      %v1517 = vpop.f32.mrb[0].mxu0
      %v1518 = vadd.f32 %v1328, %v1517
      %v1519 = vpop.f32.mrb[0].mxu0
      %1520 = vmatprep.mubr.f32.mxu0 0.0
      %1521 = vmatmul.mubr.f32.gmra.mrb[0].mxu0 %v1356
      %v1522 = vpop.f32.mrb[0].mxu0
      %v1523 = vadd.f32 %v1328, %v1522
      %v1524 = vpop.f32.mrb[0].mxu0
      %1525 = vmatprep.mubr.f32.mxu0 0.0
      %1526 = vmatmul.mubr.f32.gmra.mrb[0].mxu0 %v1359
      %v1527 = vpop.f32.mrb[0].mxu0
      %v1528 = vadd.f32 %v1328, %v1527
      %v1529 = vpop.f32.mrb[0].mxu0
      %1530 = vmatprep.mubr.f32.mxu0 0.0
      %1531 = vmatmul.mubr.f32.gmra.mrb[0].mxu0 %v1362
      %v1532 = vpop.f32.mrb[0].mxu0
      %v1533 = vadd.f32 %v1328, %v1532
      %v1534 = vpop.f32.mrb[0].mxu0
      %1535 = vmatprep.mubr.f32.mxu0 0.0
      %1536 = vmatmul.mubr.f32.gmra.mrb[0].mxu0 %v1365
      %v1537 = vpop.f32.mrb[0].mxu0
      %v1538 = vadd.f32 %v1328, %v1537
      %v1539 = vpop.f32.mrb[0].mxu0
      %1540 = vmatprep.mubr.f32.mxu0 0.0
      %1541 = vmatmul.mubr.f32.gmra.mrb[0].mxu0 %v1368
      %v1542 = vpop.f32.mrb[0].mxu0
      %v1543 = vadd.f32 %v1328, %v1542
      %v1544 = vpop.f32.mrb[0].mxu0
      %1545 = vmatprep.mubr.f32.mxu0 0.0
      %1546 = vmatmul.mubr.f32.gmra.mrb[0].mxu0 %v1371
      %v1547 = vpop.f32.mrb[0].mxu0
      %v1548 = vadd.f32 %v1328, %v1547
      %v1549 = vpop.f32.mrb[0].mxu0
      %1550 = vmatprep.mubr.f32.mxu0 0.0
      %1551 = vmatmul.mubr.f32.gmra.mrb[0].mxu0 %v1374
      %v1552 = vpop.f32.mrb[0].mxu0
      %v1553 = vadd.f32 %v1328, %v1552
      %v1554 = vpop.f32.mrb[0].mxu0
      %1555 = vmatprep.mubr.f32.mxu0 0.0
      %1556 = vmatmul.mubr.f32.gmra.mrb[0].mxu0 %v1377
      %v1557 = vpop.f32.mrb[0].mxu0
      %v1558 = vadd.f32 %v1328, %v1557
      %v1559 = vpop.f32.mrb[0].mxu0
      %1560 = vmatprep.mubr.f32.mxu0 0.0
      %1561 = vmatmul.mubr.f32.gmra.mrb[0].mxu0 %v1380
      %v1562 = vpop.f32.mrb[0].mxu0
      %v1563 = vadd.f32 %v1328, %v1562
      %v1564 = vpop.f32.mrb[0].mxu0
      %1565 = vmatprep.mubr.f32.mxu0 0.0
      %1566 = vmatmul.mubr.f32.gmra.mrb[0].mxu0 %v1383
      %v1567 = vpop.f32.mrb[0].mxu0
      %v1568 = vadd.f32 %v1328, %v1567
      %v1569 = vpop.f32.mrb[0].mxu0
      %1570 = vmatprep.mubr.f32.mxu0 0.0
      %1571 = vmatmul.mubr.f32.gmra.mrb[0].mxu0 %v1386
      %v1572 = vpop.f32.mrb[0].mxu0
      %v1573 = vadd.f32 %v1328, %v1572
      %v1574 = vpop.f32.mrb[0].mxu0
      %1575 = vmatprep.mubr.f32.mxu0 0.0
      %1576 = vmatmul.mubr.f32.gmra.mrb[0].mxu0 %v1389
      %v1577 = vpop.f32.mrb[0].mxu0
      %v1578 = vadd.f32 %v1328, %v1577
      %v1579 = vpop.f32.mrb[0].mxu0
      %1580 = vmatprep.mubr.f32.mxu0 0.0
      %1581 = vmatmul.mubr.f32.gmra.mrb[0].mxu0 %v1392
      %v1582 = vpop.f32.mrb[0].mxu0
      %v1583 = vadd.f32 %v1328, %v1582
      %v1584 = vpop.f32.mrb[0].mxu0
      %1585 = vmatprep.mubr.f32.mxu0 0.0
      %1586 = vmatmul.mubr.f32.gmra.mrb[0].mxu0 %v1395
      %v1587 = vpop.f32.mrb[0].mxu0
      %v1588 = vadd.f32 %v1328, %v1587
      %v1589 = vpop.f32.mrb[0].mxu0
      %1590 = vmatprep.mubr.f32.mxu0 0.0
      %1591 = vmatmul.mubr.f32.gmra.mrb[0].mxu0 %v1398
      %v1592 = vpop.f32.mrb[0].mxu0
      %v1593 = vadd.f32 %v1328, %v1592
      %v1594 = vpop.f32.mrb[0].mxu0
      %1595 = vmatprep.mubr.f32.mxu0 0.0
      %1596 = vmatmul.mubr.f32.gmra.mrb[0].mxu0 %v1401
      %v1597 = vpop.f32.mrb[0].mxu0
      %v1598 = vadd.f32 %v1328, %v1597
      %v1599 = vpop.f32.mrb[0].mxu0
      %1600 = vmatprep.mubr.f32.mxu0 0.0
      %1601 = vmatmul.mubr.f32.gmra.mrb[0].mxu0 %v1404
      %v1602 = vpop.f32.mrb[0].mxu0
      %v1603 = vadd.f32 %v1328, %v1602
      %v1604 = vpop.f32.mrb[0].mxu0
      %1605 = vmatprep.mubr.f32.mxu0 0.0
      %1606 = vmatmul.mubr.f32.gmra.mrb[0].mxu0 %v1407
      %v1607 = vpop.f32.mrb[0].mxu0
      %v1608 = vadd.f32 %v1328, %v1607
      %v1609 = vpop.f32.mrb[0].mxu0
      %1610 = vmatprep.mubr.f32.mxu0 0.0
      %1611 = vmatmul.mubr.f32.gmra.mrb[0].mxu0 %v1410
      %v1612 = vpop.f32.mrb[0].mxu0
      %v1613 = vadd.f32 %v1328, %v1612
      %v1614 = vpop.f32.mrb[0].mxu0
      %1615 = vdwg.mxu0
      %v1616 = vmax.f32 %v1483, 0.0
      %v1617 = vmax.f32 %v1488, 0.0
      %v1618 = vmax.f32 %v1493, 0.0
      %v1619 = vmax.f32 %v1498, 0.0
      %v1620 = vmax.f32 %v1503, 0.0
      %v1621 = vmax.f32 %v1508, 0.0
      %v1622 = vmax.f32 %v1513, 0.0
      %v1623 = vmax.f32 %v1518, 0.0
      %v1624 = vmax.f32 %v1523, 0.0
      %v1625 = vmax.f32 %v1528, 0.0
      %v1626 = vmax.f32 %v1533, 0.0
      %v1627 = vmax.f32 %v1538, 0.0
      %v1628 = vmax.f32 %v1543, 0.0
      %v1629 = vmax.f32 %v1548, 0.0
      %v1630 = vmax.f32 %v1553, 0.0
      %v1631 = vmax.f32 %v1558, 0.0
      %v1632 = vmax.f32 %v1563, 0.0
      %v1633 = vmax.f32 %v1568, 0.0
      %v1634 = vmax.f32 %v1573, 0.0
      %v1635 = vmax.f32 %v1578, 0.0
      %v1636 = vmax.f32 %v1583, 0.0
      %v1637 = vmax.f32 %v1588, 0.0
      %v1638 = vmax.f32 %v1593, 0.0
      %v1639 = vmax.f32 %v1598, 0.0
      %v1640 = vmax.f32 %v1603, 0.0
      %v1641 = vmax.f32 %v1608, 0.0
      %v1642 = vmax.f32 %v1613, 0.0
      %v1643 = vld [vmem:[%s4] sm:$0x1]
      %v1644 = vld [vmem:[%s5] sm:$0xff]
      %v1645 = vld [vmem:[%s5 + $0x8] sm:$0xff]
      %v1646 = vld [vmem:[%s5 + $0x10] sm:$0xff]
      %v1647 = vld [vmem:[%s5 + $0x18] sm:$0xff]
      %v1648 = vld [vmem:[%s5 + $0x20] sm:$0xff]
      %v1649 = vld [vmem:[%s5 + $0x28] sm:$0xff]
      %v1650 = vld [vmem:[%s5 + $0x30] sm:$0xff]
      %v1651 = vld [vmem:[%s5 + $0x38] sm:$0xff]
      %v1652 = vld [vmem:[%s5 + $0x40] sm:$0xff]
      %v1653 = vld [vmem:[%s5 + $0x48] sm:$0xff]
      %1676 = vrot.lane.b32.xlu0 %v1618, 8
      %v1677 = vpop.permute.xlu0 %1676
      %1678 = vrot.lane.b32.xlu0 %v1619, 8
      %v1679 = vpop.permute.xlu0 %1678
      %1680 = vrot.lane.b32.xlu0 %v1620, 8
      %v1681 = vpop.permute.xlu0 %1680
      %1682 = vrot.lane.b32.xlu0 %v1621, 8
      %v1683 = vpop.permute.xlu0 %1682
      %1684 = vrot.lane.b32.xlu0 %v1622, 8
      %v1685 = vpop.permute.xlu0 %1684
      %1686 = vrot.lane.b32.xlu0 %v1623, 8
      %v1687 = vpop.permute.xlu0 %1686
      %1688 = vrot.lane.b32.xlu0 %v1624, 8
      %v1689 = vpop.permute.xlu0 %1688
      %1690 = vrot.lane.b32.xlu0 %v1625, 8
      %v1691 = vpop.permute.xlu0 %1690
      %1692 = vrot.lane.b32.xlu0 %v1626, 8
      %v1693 = vpop.permute.xlu0 %1692
      %1694 = vrot.lane.b32.xlu0 %v1627, 8
      %v1695 = vpop.permute.xlu0 %1694
      %1696 = vrot.lane.b32.xlu0 %v1628, 8
      %v1697 = vpop.permute.xlu0 %1696
      %1698 = vrot.lane.b32.xlu0 %v1629, 8
      %v1699 = vpop.permute.xlu0 %1698
      %1700 = vrot.lane.b32.xlu0 %v1630, 8
      %v1701 = vpop.permute.xlu0 %1700
      %1702 = vrot.lane.b32.xlu0 %v1631, 8
      %v1703 = vpop.permute.xlu0 %1702
      %1704 = vrot.lane.b32.xlu0 %v1632, 8
      %v1705 = vpop.permute.xlu0 %1704
      %1706 = vrot.lane.b32.xlu0 %v1633, 8
      %v1707 = vpop.permute.xlu0 %1706
      %1708 = vrot.lane.b32.xlu0 %v1634, 8
      %v1709 = vpop.permute.xlu0 %1708
      %1710 = vrot.lane.b32.xlu0 %v1635, 8
      %v1711 = vpop.permute.xlu0 %1710
      %1712 = vrot.lane.b32.xlu0 %v1636, 8
      %v1713 = vpop.permute.xlu0 %1712
      %1714 = vrot.lane.b32.xlu0 %v1637, 8
      %v1715 = vpop.permute.xlu0 %1714
      %1716 = vrot.lane.b32.xlu0 %v1638, 8
      %v1717 = vpop.permute.xlu0 %1716
      %1718 = vrot.lane.b32.xlu0 %v1639, 8
      %v1719 = vpop.permute.xlu0 %1718
      %1744 = vrot.lane.b32.xlu0 %v1620, 16
      %v1745 = vpop.permute.xlu0 %1744
      %1746 = vrot.lane.b32.xlu0 %v1621, 16
      %v1747 = vpop.permute.xlu0 %1746
      %1748 = vrot.lane.b32.xlu0 %v1622, 16
      %v1749 = vpop.permute.xlu0 %1748
      %1750 = vrot.lane.b32.xlu0 %v1623, 16
      %v1751 = vpop.permute.xlu0 %1750
      %1752 = vrot.lane.b32.xlu0 %v1624, 16
      %v1753 = vpop.permute.xlu0 %1752
      %1754 = vrot.lane.b32.xlu0 %v1625, 16
      %v1755 = vpop.permute.xlu0 %1754
      %1756 = vrot.lane.b32.xlu0 %v1626, 16
      %v1757 = vpop.permute.xlu0 %1756
      %1758 = vrot.lane.b32.xlu0 %v1627, 16
      %v1759 = vpop.permute.xlu0 %1758
      %1760 = vrot.lane.b32.xlu0 %v1628, 16
      %v1761 = vpop.permute.xlu0 %1760
      %1762 = vrot.lane.b32.xlu0 %v1629, 16
      %v1763 = vpop.permute.xlu0 %1762
      %1764 = vrot.lane.b32.xlu0 %v1630, 16
      %v1765 = vpop.permute.xlu0 %1764
      %1766 = vrot.lane.b32.xlu0 %v1631, 16
      %v1767 = vpop.permute.xlu0 %1766
      %1768 = vrot.lane.b32.xlu0 %v1632, 16
      %v1769 = vpop.permute.xlu0 %1768
      %1770 = vrot.lane.b32.xlu0 %v1633, 16
      %v1771 = vpop.permute.xlu0 %1770
      %1772 = vrot.lane.b32.xlu0 %v1634, 16
      %v1773 = vpop.permute.xlu0 %1772
      %1774 = vrot.lane.b32.xlu0 %v1635, 16
      %v1775 = vpop.permute.xlu0 %1774
      %1776 = vrot.lane.b32.xlu0 %v1636, 16
      %v1777 = vpop.permute.xlu0 %1776
      %1778 = vrot.lane.b32.xlu0 %v1637, 16
      %v1779 = vpop.permute.xlu0 %1778
      %1780 = vrot.lane.b32.xlu0 %v1638, 16
      %v1781 = vpop.permute.xlu0 %1780
      %1782 = vrot.lane.b32.xlu0 %v1639, 16
      %v1783 = vpop.permute.xlu0 %1782
      %1784 = vrot.lane.b32.xlu0 %v1640, 16
      %v1785 = vpop.permute.xlu0 %1784
      %1786 = vrot.lane.b32.xlu0 %v1641, 16
      %v1787 = vpop.permute.xlu0 %1786
      %v1812 = vrot.slane %v1616, 1
      %v1813 = vrot.slane %v1617, 1
      %v1814 = vsel %vm480, %v1812, %v1813
      %v1815 = vrot.slane %v1618, 1
      %v1816 = vsel %vm480, %v1813, %v1815
      %v1817 = vrot.slane %v1619, 1
      %v1818 = vsel %vm480, %v1815, %v1817
      %v1819 = vrot.slane %v1620, 1
      %v1820 = vsel %vm480, %v1817, %v1819
      %v1821 = vrot.slane %v1621, 1
      %v1822 = vsel %vm480, %v1819, %v1821
      %v1823 = vrot.slane %v1622, 1
      %v1824 = vsel %vm480, %v1821, %v1823
      %v1825 = vrot.slane %v1623, 1
      %v1826 = vsel %vm480, %v1823, %v1825
      %v1827 = vrot.slane %v1624, 1
      %v1828 = vsel %vm480, %v1825, %v1827
      %v1829 = vrot.slane %v1625, 1
      %v1830 = vsel %vm480, %v1827, %v1829
      %v1831 = vrot.slane %v1626, 1
      %v1832 = vsel %vm480, %v1829, %v1831
      %v1833 = vrot.slane %v1627, 1
      %v1834 = vsel %vm480, %v1831, %v1833
      %v1835 = vrot.slane %v1628, 1
      %v1836 = vsel %vm480, %v1833, %v1835
      %v1837 = vrot.slane %v1629, 1
      %v1838 = vsel %vm480, %v1835, %v1837
      %v1839 = vrot.slane %v1630, 1
      %v1840 = vsel %vm480, %v1837, %v1839
      %v1841 = vrot.slane %v1631, 1
      %v1842 = vsel %vm480, %v1839, %v1841
      %v1843 = vrot.slane %v1632, 1
      %v1844 = vsel %vm480, %v1841, %v1843
      %v1845 = vrot.slane %v1633, 1
      %v1846 = vsel %vm480, %v1843, %v1845
      %v1847 = vrot.slane %v1634, 1
      %v1848 = vsel %vm480, %v1845, %v1847
      %v1849 = vrot.slane %v1635, 1
      %v1850 = vsel %vm480, %v1847, %v1849
      %v1851 = vrot.slane %v1636, 1
      %v1852 = vsel %vm480, %v1849, %v1851
      %v1853 = vrot.slane %v1637, 1
      %v1854 = vsel %vm480, %v1851, %v1853
      %v1855 = vrot.slane %v1638, 1
      %v1856 = vsel %vm480, %v1853, %v1855
      %1857 = vrot.lane.b32.xlu0 %v1814, 24
      %v1858 = vpop.permute.xlu0 %1857
      %1859 = vrot.lane.b32.xlu0 %v1816, 24
      %v1860 = vpop.permute.xlu0 %1859
      %1861 = vrot.lane.b32.xlu0 %v1818, 24
      %v1862 = vpop.permute.xlu0 %1861
      %1863 = vrot.lane.b32.xlu0 %v1820, 24
      %v1864 = vpop.permute.xlu0 %1863
      %1865 = vrot.lane.b32.xlu0 %v1822, 24
      %v1866 = vpop.permute.xlu0 %1865
      %1867 = vrot.lane.b32.xlu0 %v1824, 24
      %v1868 = vpop.permute.xlu0 %1867
      %1869 = vrot.lane.b32.xlu0 %v1826, 24
      %v1870 = vpop.permute.xlu0 %1869
      %1871 = vrot.lane.b32.xlu0 %v1828, 24
      %v1872 = vpop.permute.xlu0 %1871
      %1873 = vrot.lane.b32.xlu0 %v1830, 24
      %v1874 = vpop.permute.xlu0 %1873
      %1875 = vrot.lane.b32.xlu0 %v1832, 24
      %v1876 = vpop.permute.xlu0 %1875
      %1877 = vrot.lane.b32.xlu0 %v1834, 24
      %v1878 = vpop.permute.xlu0 %1877
      %1879 = vrot.lane.b32.xlu0 %v1836, 24
      %v1880 = vpop.permute.xlu0 %1879
      %1881 = vrot.lane.b32.xlu0 %v1838, 24
      %v1882 = vpop.permute.xlu0 %1881
      %1883 = vrot.lane.b32.xlu0 %v1840, 24
      %v1884 = vpop.permute.xlu0 %1883
      %1885 = vrot.lane.b32.xlu0 %v1842, 24
      %v1886 = vpop.permute.xlu0 %1885
      %1887 = vrot.lane.b32.xlu0 %v1844, 24
      %v1888 = vpop.permute.xlu0 %1887
      %1889 = vrot.lane.b32.xlu0 %v1846, 24
      %v1890 = vpop.permute.xlu0 %1889
      %1891 = vrot.lane.b32.xlu0 %v1848, 24
      %v1892 = vpop.permute.xlu0 %1891
      %1893 = vrot.lane.b32.xlu0 %v1850, 24
      %v1894 = vpop.permute.xlu0 %1893
      %1895 = vrot.lane.b32.xlu0 %v1852, 24
      %v1896 = vpop.permute.xlu0 %1895
      %1897 = vrot.lane.b32.xlu0 %v1854, 24
      %v1898 = vpop.permute.xlu0 %1897
      %1899 = vrot.lane.b32.xlu0 %v1856, 24
      %v1900 = vpop.permute.xlu0 %1899
      %v1923 = vrot.slane %v1639, 1
      %v1924 = vsel %vm480, %v1855, %v1923
      %v1925 = vrot.slane %v1640, 1
      %v1926 = vsel %vm480, %v1923, %v1925
      %1927 = vrot.lane.b32.xlu0 %v1818, 32
      %v1928 = vpop.permute.xlu0 %1927
      %1929 = vrot.lane.b32.xlu0 %v1820, 32
      %v1930 = vpop.permute.xlu0 %1929
      %1931 = vrot.lane.b32.xlu0 %v1822, 32
      %v1932 = vpop.permute.xlu0 %1931
      %1933 = vrot.lane.b32.xlu0 %v1824, 32
      %v1934 = vpop.permute.xlu0 %1933
      %1935 = vrot.lane.b32.xlu0 %v1826, 32
      %v1936 = vpop.permute.xlu0 %1935
      %1937 = vrot.lane.b32.xlu0 %v1828, 32
      %v1938 = vpop.permute.xlu0 %1937
      %1939 = vrot.lane.b32.xlu0 %v1830, 32
      %v1940 = vpop.permute.xlu0 %1939
      %1941 = vrot.lane.b32.xlu0 %v1832, 32
      %v1942 = vpop.permute.xlu0 %1941
      %1943 = vrot.lane.b32.xlu0 %v1834, 32
      %v1944 = vpop.permute.xlu0 %1943
      %1945 = vrot.lane.b32.xlu0 %v1836, 32
      %v1946 = vpop.permute.xlu0 %1945
      %1947 = vrot.lane.b32.xlu0 %v1838, 32
      %v1948 = vpop.permute.xlu0 %1947
      %1949 = vrot.lane.b32.xlu0 %v1840, 32
      %v1950 = vpop.permute.xlu0 %1949
      %1951 = vrot.lane.b32.xlu0 %v1842, 32
      %v1952 = vpop.permute.xlu0 %1951
      %1953 = vrot.lane.b32.xlu0 %v1844, 32
      %v1954 = vpop.permute.xlu0 %1953
      %1955 = vrot.lane.b32.xlu0 %v1846, 32
      %v1956 = vpop.permute.xlu0 %1955
      %1957 = vrot.lane.b32.xlu0 %v1848, 32
      %v1958 = vpop.permute.xlu0 %1957
      %1959 = vrot.lane.b32.xlu0 %v1850, 32
      %v1960 = vpop.permute.xlu0 %1959
      %1961 = vrot.lane.b32.xlu0 %v1852, 32
      %v1962 = vpop.permute.xlu0 %1961
      %1963 = vrot.lane.b32.xlu0 %v1854, 32
      %v1964 = vpop.permute.xlu0 %1963
      %1965 = vrot.lane.b32.xlu0 %v1856, 32
      %v1966 = vpop.permute.xlu0 %1965
      %1967 = vrot.lane.b32.xlu0 %v1924, 32
      %v1968 = vpop.permute.xlu0 %1967
      %1969 = vrot.lane.b32.xlu0 %v1926, 32
      %v1970 = vpop.permute.xlu0 %1969
      %v1994 = vrot.slane %v1641, 1
      %v1995 = vsel %vm480, %v1925, %v1994
      %v1996 = vrot.slane %v1642, 1
      %v1997 = vsel %vm480, %v1994, %v1996
      %1998 = vrot.lane.b32.xlu0 %v1822, 40
      %v1999 = vpop.permute.xlu0 %1998
      %2000 = vrot.lane.b32.xlu0 %v1824, 40
      %v2001 = vpop.permute.xlu0 %2000
      %2002 = vrot.lane.b32.xlu0 %v1826, 40
      %v2003 = vpop.permute.xlu0 %2002
      %2004 = vrot.lane.b32.xlu0 %v1828, 40
      %v2005 = vpop.permute.xlu0 %2004
      %2006 = vrot.lane.b32.xlu0 %v1830, 40
      %v2007 = vpop.permute.xlu0 %2006
      %2008 = vrot.lane.b32.xlu0 %v1832, 40
      %v2009 = vpop.permute.xlu0 %2008
      %2010 = vrot.lane.b32.xlu0 %v1834, 40
      %v2011 = vpop.permute.xlu0 %2010
      %2012 = vrot.lane.b32.xlu0 %v1836, 40
      %v2013 = vpop.permute.xlu0 %2012
      %2014 = vrot.lane.b32.xlu0 %v1838, 40
      %v2015 = vpop.permute.xlu0 %2014
      %2016 = vrot.lane.b32.xlu0 %v1840, 40
      %v2017 = vpop.permute.xlu0 %2016
      %2018 = vrot.lane.b32.xlu0 %v1842, 40
      %v2019 = vpop.permute.xlu0 %2018
      %2020 = vrot.lane.b32.xlu0 %v1844, 40
      %v2021 = vpop.permute.xlu0 %2020
      %2022 = vrot.lane.b32.xlu0 %v1846, 40
      %v2023 = vpop.permute.xlu0 %2022
      %2024 = vrot.lane.b32.xlu0 %v1848, 40
      %v2025 = vpop.permute.xlu0 %2024
      %2026 = vrot.lane.b32.xlu0 %v1850, 40
      %v2027 = vpop.permute.xlu0 %2026
      %2028 = vrot.lane.b32.xlu0 %v1852, 40
      %v2029 = vpop.permute.xlu0 %2028
      %2030 = vrot.lane.b32.xlu0 %v1854, 40
      %v2031 = vpop.permute.xlu0 %2030
      %2032 = vrot.lane.b32.xlu0 %v1856, 40
      %v2033 = vpop.permute.xlu0 %2032
      %2034 = vrot.lane.b32.xlu0 %v1924, 40
      %v2035 = vpop.permute.xlu0 %2034
      %2036 = vrot.lane.b32.xlu0 %v1926, 40
      %v2037 = vpop.permute.xlu0 %2036
      %2038 = vrot.lane.b32.xlu0 %v1995, 40
      %v2039 = vpop.permute.xlu0 %2038
      %2040 = vrot.lane.b32.xlu0 %v1997, 40
      %v2041 = vpop.permute.xlu0 %2040
      %v2064 = vrot.slane %v1616, 2
      %v2065 = vrot.slane %v1617, 2
      %v2066 = vsel %vm788, %v2064, %v2065
      %v2067 = vrot.slane %v1618, 2
      %v2068 = vsel %vm788, %v2065, %v2067
      %v2069 = vrot.slane %v1619, 2
      %v2070 = vsel %vm788, %v2067, %v2069
      %v2071 = vrot.slane %v1620, 2
      %v2072 = vsel %vm788, %v2069, %v2071
      %v2073 = vrot.slane %v1621, 2
      %v2074 = vsel %vm788, %v2071, %v2073
      %v2075 = vrot.slane %v1622, 2
      %v2076 = vsel %vm788, %v2073, %v2075
      %v2077 = vrot.slane %v1623, 2
      %v2078 = vsel %vm788, %v2075, %v2077
      %v2079 = vrot.slane %v1624, 2
      %v2080 = vsel %vm788, %v2077, %v2079
      %v2081 = vrot.slane %v1625, 2
      %v2082 = vsel %vm788, %v2079, %v2081
      %v2083 = vrot.slane %v1626, 2
      %v2084 = vsel %vm788, %v2081, %v2083
      %v2085 = vrot.slane %v1627, 2
      %v2086 = vsel %vm788, %v2083, %v2085
      %v2087 = vrot.slane %v1628, 2
      %v2088 = vsel %vm788, %v2085, %v2087
      %v2089 = vrot.slane %v1629, 2
      %v2090 = vsel %vm788, %v2087, %v2089
      %v2091 = vrot.slane %v1630, 2
      %v2092 = vsel %vm788, %v2089, %v2091
      %v2093 = vrot.slane %v1631, 2
      %v2094 = vsel %vm788, %v2091, %v2093
      %v2095 = vrot.slane %v1632, 2
      %v2096 = vsel %vm788, %v2093, %v2095
      %v2097 = vrot.slane %v1633, 2
      %v2098 = vsel %vm788, %v2095, %v2097
      %v2099 = vrot.slane %v1634, 2
      %v2100 = vsel %vm788, %v2097, %v2099
      %v2101 = vrot.slane %v1635, 2
      %v2102 = vsel %vm788, %v2099, %v2101
      %v2103 = vrot.slane %v1636, 2
      %v2104 = vsel %vm788, %v2101, %v2103
      %v2105 = vrot.slane %v1637, 2
      %v2106 = vsel %vm788, %v2103, %v2105
      %v2107 = vrot.slane %v1638, 2
      %v2108 = vsel %vm788, %v2105, %v2107
      %2109 = vrot.lane.b32.xlu0 %v2066, 48
      %v2110 = vpop.permute.xlu0 %2109
      %2111 = vrot.lane.b32.xlu0 %v2068, 48
      %v2112 = vpop.permute.xlu0 %2111
      %2113 = vrot.lane.b32.xlu0 %v2070, 48
      %v2114 = vpop.permute.xlu0 %2113
      %2115 = vrot.lane.b32.xlu0 %v2072, 48
      %v2116 = vpop.permute.xlu0 %2115
      %2117 = vrot.lane.b32.xlu0 %v2074, 48
      %v2118 = vpop.permute.xlu0 %2117
      %2119 = vrot.lane.b32.xlu0 %v2076, 48
      %v2120 = vpop.permute.xlu0 %2119
      %2121 = vrot.lane.b32.xlu0 %v2078, 48
      %v2122 = vpop.permute.xlu0 %2121
      %2123 = vrot.lane.b32.xlu0 %v2080, 48
      %v2124 = vpop.permute.xlu0 %2123
      %2125 = vrot.lane.b32.xlu0 %v2082, 48
      %v2126 = vpop.permute.xlu0 %2125
      %2127 = vrot.lane.b32.xlu0 %v2084, 48
      %v2128 = vpop.permute.xlu0 %2127
      %2129 = vrot.lane.b32.xlu0 %v2086, 48
      %v2130 = vpop.permute.xlu0 %2129
      %2131 = vrot.lane.b32.xlu0 %v2088, 48
      %v2132 = vpop.permute.xlu0 %2131
      %2133 = vrot.lane.b32.xlu0 %v2090, 48
      %v2134 = vpop.permute.xlu0 %2133
      %2135 = vrot.lane.b32.xlu0 %v2092, 48
      %v2136 = vpop.permute.xlu0 %2135
      %2137 = vrot.lane.b32.xlu0 %v2094, 48
      %v2138 = vpop.permute.xlu0 %2137
      %2139 = vrot.lane.b32.xlu0 %v2096, 48
      %v2140 = vpop.permute.xlu0 %2139
      %2141 = vrot.lane.b32.xlu0 %v2098, 48
      %v2142 = vpop.permute.xlu0 %2141
      %2143 = vrot.lane.b32.xlu0 %v2100, 48
      %v2144 = vpop.permute.xlu0 %2143
      %2145 = vrot.lane.b32.xlu0 %v2102, 48
      %v2146 = vpop.permute.xlu0 %2145
      %2147 = vrot.lane.b32.xlu0 %v2104, 48
      %v2148 = vpop.permute.xlu0 %2147
      %2149 = vrot.lane.b32.xlu0 %v2106, 48
      %v2150 = vpop.permute.xlu0 %2149
      %2151 = vrot.lane.b32.xlu0 %v2108, 48
      %v2152 = vpop.permute.xlu0 %2151
      %v2175 = vrot.slane %v1639, 2
      %v2176 = vsel %vm788, %v2107, %v2175
      %v2177 = vrot.slane %v1640, 2
      %v2178 = vsel %vm788, %v2175, %v2177
      %2179 = vrot.lane.b32.xlu0 %v2070, 56
      %v2180 = vpop.permute.xlu0 %2179
      %2181 = vrot.lane.b32.xlu0 %v2072, 56
      %v2182 = vpop.permute.xlu0 %2181
      %2183 = vrot.lane.b32.xlu0 %v2074, 56
      %v2184 = vpop.permute.xlu0 %2183
      %2185 = vrot.lane.b32.xlu0 %v2076, 56
      %v2186 = vpop.permute.xlu0 %2185
      %2187 = vrot.lane.b32.xlu0 %v2078, 56
      %v2188 = vpop.permute.xlu0 %2187
      %2189 = vrot.lane.b32.xlu0 %v2080, 56
      %v2190 = vpop.permute.xlu0 %2189
      %2191 = vrot.lane.b32.xlu0 %v2082, 56
      %v2192 = vpop.permute.xlu0 %2191
      %2193 = vrot.lane.b32.xlu0 %v2084, 56
      %v2194 = vpop.permute.xlu0 %2193
      %2195 = vrot.lane.b32.xlu0 %v2086, 56
      %v2196 = vpop.permute.xlu0 %2195
      %2197 = vrot.lane.b32.xlu0 %v2088, 56
      %v2198 = vpop.permute.xlu0 %2197
      %2199 = vrot.lane.b32.xlu0 %v2090, 56
      %v2200 = vpop.permute.xlu0 %2199
      %2201 = vrot.lane.b32.xlu0 %v2092, 56
      %v2202 = vpop.permute.xlu0 %2201
      %2203 = vrot.lane.b32.xlu0 %v2094, 56
      %v2204 = vpop.permute.xlu0 %2203
      %2205 = vrot.lane.b32.xlu0 %v2096, 56
      %v2206 = vpop.permute.xlu0 %2205
      %2207 = vrot.lane.b32.xlu0 %v2098, 56
      %v2208 = vpop.permute.xlu0 %2207
      %2209 = vrot.lane.b32.xlu0 %v2100, 56
      %v2210 = vpop.permute.xlu0 %2209
      %2211 = vrot.lane.b32.xlu0 %v2102, 56
      %v2212 = vpop.permute.xlu0 %2211
      %2213 = vrot.lane.b32.xlu0 %v2104, 56
      %v2214 = vpop.permute.xlu0 %2213
      %2215 = vrot.lane.b32.xlu0 %v2106, 56
      %v2216 = vpop.permute.xlu0 %2215
      %2217 = vrot.lane.b32.xlu0 %v2108, 56
      %v2218 = vpop.permute.xlu0 %2217
      %2219 = vrot.lane.b32.xlu0 %v2176, 56
      %v2220 = vpop.permute.xlu0 %2219
      %2221 = vrot.lane.b32.xlu0 %v2178, 56
      %v2222 = vpop.permute.xlu0 %2221
      %v2245 = vrot.slane %v1641, 2
      %v2246 = vsel %vm788, %v2177, %v2245
      %v2247 = vrot.slane %v1642, 2
      %v2248 = vsel %vm788, %v2245, %v2247
      %2249 = vrot.lane.b32.xlu0 %v2074, 64
      %v2250 = vpop.permute.xlu0 %2249
      %2251 = vrot.lane.b32.xlu0 %v2076, 64
      %v2252 = vpop.permute.xlu0 %2251
      %2253 = vrot.lane.b32.xlu0 %v2078, 64
      %v2254 = vpop.permute.xlu0 %2253
      %2255 = vrot.lane.b32.xlu0 %v2080, 64
      %v2256 = vpop.permute.xlu0 %2255
      %2257 = vrot.lane.b32.xlu0 %v2082, 64
      %v2258 = vpop.permute.xlu0 %2257
      %2259 = vrot.lane.b32.xlu0 %v2084, 64
      %v2260 = vpop.permute.xlu0 %2259
      %2261 = vrot.lane.b32.xlu0 %v2086, 64
      %v2262 = vpop.permute.xlu0 %2261
      %2263 = vrot.lane.b32.xlu0 %v2088, 64
      %v2264 = vpop.permute.xlu0 %2263
      %2265 = vrot.lane.b32.xlu0 %v2090, 64
      %v2266 = vpop.permute.xlu0 %2265
      %2267 = vrot.lane.b32.xlu0 %v2092, 64
      %v2268 = vpop.permute.xlu0 %2267
      %2269 = vrot.lane.b32.xlu0 %v2094, 64
      %v2270 = vpop.permute.xlu0 %2269
      %2271 = vrot.lane.b32.xlu0 %v2096, 64
      %v2272 = vpop.permute.xlu0 %2271
      %2273 = vrot.lane.b32.xlu0 %v2098, 64
      %v2274 = vpop.permute.xlu0 %2273
      %2275 = vrot.lane.b32.xlu0 %v2100, 64
      %v2276 = vpop.permute.xlu0 %2275
      %2277 = vrot.lane.b32.xlu0 %v2102, 64
      %v2278 = vpop.permute.xlu0 %2277
      %2279 = vrot.lane.b32.xlu0 %v2104, 64
      %v2280 = vpop.permute.xlu0 %2279
      %2281 = vrot.lane.b32.xlu0 %v2106, 64
      %v2282 = vpop.permute.xlu0 %2281
      %2283 = vrot.lane.b32.xlu0 %v2108, 64
      %v2284 = vpop.permute.xlu0 %2283
      %2285 = vrot.lane.b32.xlu0 %v2176, 64
      %v2286 = vpop.permute.xlu0 %2285
      %2287 = vrot.lane.b32.xlu0 %v2178, 64
      %v2288 = vpop.permute.xlu0 %2287
      %2289 = vrot.lane.b32.xlu0 %v2246, 64
      %v2290 = vpop.permute.xlu0 %2289
      %2291 = vrot.lane.b32.xlu0 %v2248, 64
      %v2292 = vpop.permute.xlu0 %2291
      %v2315 = vsel %vm1123, %v1616, %v1677
      %v2316 = vsel %vm1123, %v1617, %v1679
      %v2317 = vsel %vm1123, %v1618, %v1681
      %v2318 = vsel %vm1123, %v1619, %v1683
      %v2319 = vsel %vm1123, %v1620, %v1685
      %v2320 = vsel %vm1123, %v1621, %v1687
      %v2321 = vsel %vm1123, %v1622, %v1689
      %v2322 = vsel %vm1123, %v1623, %v1691
      %v2323 = vsel %vm1123, %v1624, %v1693
      %v2324 = vsel %vm1123, %v1625, %v1695
      %v2325 = vsel %vm1123, %v1626, %v1697
      %v2326 = vsel %vm1123, %v1627, %v1699
      %v2327 = vsel %vm1123, %v1628, %v1701
      %v2328 = vsel %vm1123, %v1629, %v1703
      %v2329 = vsel %vm1123, %v1630, %v1705
      %v2330 = vsel %vm1123, %v1631, %v1707
      %v2331 = vsel %vm1123, %v1632, %v1709
      %v2332 = vsel %vm1123, %v1633, %v1711
      %v2333 = vsel %vm1123, %v1634, %v1713
      %v2334 = vsel %vm1123, %v1635, %v1715
      %v2335 = vsel %vm1123, %v1636, %v1717
      %v2336 = vsel %vm1123, %v1637, %v1719
      %v2337 = vsel %vm1179, %v2315, %v1745
      %v2338 = vsel %vm1179, %v2316, %v1747
      %v2339 = vsel %vm1179, %v2317, %v1749
      %v2340 = vsel %vm1179, %v2318, %v1751
      %v2341 = vsel %vm1179, %v2319, %v1753
      %v2342 = vsel %vm1179, %v2320, %v1755
      %v2343 = vsel %vm1179, %v2321, %v1757
      %v2344 = vsel %vm1179, %v2322, %v1759
      %v2345 = vsel %vm1179, %v2323, %v1761
      %v2346 = vsel %vm1179, %v2324, %v1763
      %v2347 = vsel %vm1179, %v2325, %v1765
      %v2348 = vsel %vm1179, %v2326, %v1767
      %v2349 = vsel %vm1179, %v2327, %v1769
      %v2350 = vsel %vm1179, %v2328, %v1771
      %v2351 = vsel %vm1179, %v2329, %v1773
      %v2352 = vsel %vm1179, %v2330, %v1775
      %v2353 = vsel %vm1179, %v2331, %v1777
      %v2354 = vsel %vm1179, %v2332, %v1779
      %v2355 = vsel %vm1179, %v2333, %v1781
      %v2356 = vsel %vm1179, %v2334, %v1783
      %v2357 = vsel %vm1179, %v2335, %v1785
      %v2358 = vsel %vm1179, %v2336, %v1787
      %v2359 = vsel %vm1235, %v2337, %v1858
      %v2360 = vsel %vm1235, %v2338, %v1860
      %v2361 = vsel %vm1235, %v2339, %v1862
      %v2362 = vsel %vm1235, %v2340, %v1864
      %v2363 = vsel %vm1235, %v2341, %v1866
      %v2364 = vsel %vm1235, %v2342, %v1868
      %v2365 = vsel %vm1235, %v2343, %v1870
      %v2366 = vsel %vm1235, %v2344, %v1872
      %v2367 = vsel %vm1235, %v2345, %v1874
      %v2368 = vsel %vm1235, %v2346, %v1876
      %v2369 = vsel %vm1235, %v2347, %v1878
      %v2370 = vsel %vm1235, %v2348, %v1880
      %v2371 = vsel %vm1235, %v2349, %v1882
      %v2372 = vsel %vm1235, %v2350, %v1884
      %v2373 = vsel %vm1235, %v2351, %v1886
      %v2374 = vsel %vm1235, %v2352, %v1888
      %v2375 = vsel %vm1235, %v2353, %v1890
      %v2376 = vsel %vm1235, %v2354, %v1892
      %v2377 = vsel %vm1235, %v2355, %v1894
      %v2378 = vsel %vm1235, %v2356, %v1896
      %v2379 = vsel %vm1235, %v2357, %v1898
      %v2380 = vsel %vm1235, %v2358, %v1900
      %v2381 = vsel %vm1291, %v2359, %v1928
      %v2382 = vsel %vm1291, %v2360, %v1930
      %v2383 = vsel %vm1291, %v2361, %v1932
      %v2384 = vsel %vm1291, %v2362, %v1934
      %v2385 = vsel %vm1291, %v2363, %v1936
      %v2386 = vsel %vm1291, %v2364, %v1938
      %v2387 = vsel %vm1291, %v2365, %v1940
      %v2388 = vsel %vm1291, %v2366, %v1942
      %v2389 = vsel %vm1291, %v2367, %v1944
      %v2390 = vsel %vm1291, %v2368, %v1946
      %v2391 = vsel %vm1291, %v2369, %v1948
      %v2392 = vsel %vm1291, %v2370, %v1950
      %v2393 = vsel %vm1291, %v2371, %v1952
      %v2394 = vsel %vm1291, %v2372, %v1954
      %v2395 = vsel %vm1291, %v2373, %v1956
      %v2396 = vsel %vm1291, %v2374, %v1958
      %v2397 = vsel %vm1291, %v2375, %v1960
      %v2398 = vsel %vm1291, %v2376, %v1962
      %v2399 = vsel %vm1291, %v2377, %v1964
      %v2400 = vsel %vm1291, %v2378, %v1966
      %v2401 = vsel %vm1291, %v2379, %v1968
      %v2402 = vsel %vm1291, %v2380, %v1970
      %vm2403 = vcmask 326656
      %v2404 = vsel %vm2403, %v2381, %v1999
      %v2405 = vsel %vm2403, %v2382, %v2001
      %v2406 = vsel %vm2403, %v2383, %v2003
      %v2407 = vsel %vm2403, %v2384, %v2005
      %v2408 = vsel %vm2403, %v2385, %v2007
      %v2409 = vsel %vm2403, %v2386, %v2009
      %v2410 = vsel %vm2403, %v2387, %v2011
      %v2411 = vsel %vm2403, %v2388, %v2013
      %v2412 = vsel %vm2403, %v2389, %v2015
      %v2413 = vsel %vm2403, %v2390, %v2017
      %v2414 = vsel %vm2403, %v2391, %v2019
      %v2415 = vsel %vm2403, %v2392, %v2021
      %v2416 = vsel %vm2403, %v2393, %v2023
      %v2417 = vsel %vm2403, %v2394, %v2025
      %v2418 = vsel %vm2403, %v2395, %v2027
      %v2419 = vsel %vm2403, %v2396, %v2029
      %v2420 = vsel %vm2403, %v2397, %v2031
      %v2421 = vsel %vm2403, %v2398, %v2033
      %v2422 = vsel %vm2403, %v2399, %v2035
      %v2423 = vsel %vm2403, %v2400, %v2037
      %v2424 = vsel %vm2403, %v2401, %v2039
      %v2425 = vsel %vm2403, %v2402, %v2041
      %vm2426 = vcmask 392192
      %v2427 = vsel %vm2426, %v2404, %v2110
      %v2428 = vsel %vm2426, %v2405, %v2112
      %v2429 = vsel %vm2426, %v2406, %v2114
      %v2430 = vsel %vm2426, %v2407, %v2116
      %v2431 = vsel %vm2426, %v2408, %v2118
      %v2432 = vsel %vm2426, %v2409, %v2120
      %v2433 = vsel %vm2426, %v2410, %v2122
      %v2434 = vsel %vm2426, %v2411, %v2124
      %v2435 = vsel %vm2426, %v2412, %v2126
      %v2436 = vsel %vm2426, %v2413, %v2128
      %v2437 = vsel %vm2426, %v2414, %v2130
      %v2438 = vsel %vm2426, %v2415, %v2132
      %v2439 = vsel %vm2426, %v2416, %v2134
      %v2440 = vsel %vm2426, %v2417, %v2136
      %v2441 = vsel %vm2426, %v2418, %v2138
      %v2442 = vsel %vm2426, %v2419, %v2140
      %v2443 = vsel %vm2426, %v2420, %v2142
      %v2444 = vsel %vm2426, %v2421, %v2144
      %v2445 = vsel %vm2426, %v2422, %v2146
      %v2446 = vsel %vm2426, %v2423, %v2148
      %v2447 = vsel %vm2426, %v2424, %v2150
      %v2448 = vsel %vm2426, %v2425, %v2152
      %vm2449 = vcmask 457728
      %v2450 = vsel %vm2449, %v2427, %v2180
      %v2451 = vsel %vm2449, %v2428, %v2182
      %v2452 = vsel %vm2449, %v2429, %v2184
      %v2453 = vsel %vm2449, %v2430, %v2186
      %v2454 = vsel %vm2449, %v2431, %v2188
      %v2455 = vsel %vm2449, %v2432, %v2190
      %v2456 = vsel %vm2449, %v2433, %v2192
      %v2457 = vsel %vm2449, %v2434, %v2194
      %v2458 = vsel %vm2449, %v2435, %v2196
      %v2459 = vsel %vm2449, %v2436, %v2198
      %v2460 = vsel %vm2449, %v2437, %v2200
      %v2461 = vsel %vm2449, %v2438, %v2202
      %v2462 = vsel %vm2449, %v2439, %v2204
      %v2463 = vsel %vm2449, %v2440, %v2206
      %v2464 = vsel %vm2449, %v2441, %v2208
      %v2465 = vsel %vm2449, %v2442, %v2210
      %v2466 = vsel %vm2449, %v2443, %v2212
      %v2467 = vsel %vm2449, %v2444, %v2214
      %v2468 = vsel %vm2449, %v2445, %v2216
      %v2469 = vsel %vm2449, %v2446, %v2218
      %v2470 = vsel %vm2449, %v2447, %v2220
      %v2471 = vsel %vm2449, %v2448, %v2222
      %vm2472 = vcmask 523264
      %v2473 = vsel %vm2472, %v2450, %v2250
      %v2474 = vsel %vm2472, %v2451, %v2252
      %v2475 = vsel %vm2472, %v2452, %v2254
      %v2476 = vsel %vm2472, %v2453, %v2256
      %v2477 = vsel %vm2472, %v2454, %v2258
      %v2478 = vsel %vm2472, %v2455, %v2260
      %v2479 = vsel %vm2472, %v2456, %v2262
      %v2480 = vsel %vm2472, %v2457, %v2264
      %v2481 = vsel %vm2472, %v2458, %v2266
      %v2482 = vsel %vm2472, %v2459, %v2268
      %v2483 = vsel %vm2472, %v2460, %v2270
      %v2484 = vsel %vm2472, %v2461, %v2272
      %v2485 = vsel %vm2472, %v2462, %v2274
      %v2486 = vsel %vm2472, %v2463, %v2276
      %v2487 = vsel %vm2472, %v2464, %v2278
      %v2488 = vsel %vm2472, %v2465, %v2280
      %v2489 = vsel %vm2472, %v2466, %v2282
      %v2490 = vsel %vm2472, %v2467, %v2284
      %v2491 = vsel %vm2472, %v2468, %v2286
      %v2492 = vsel %vm2472, %v2469, %v2288
      %v2493 = vsel %vm2472, %v2470, %v2290
      %v2494 = vsel %vm2472, %v2471, %v2292
      %v2495 = vld [vmem:[%s3] sm:$0xff]
      %v2496 = vld [vmem:[%s3 + $0x8] sm:$0xff]
      %v2497 = vld [vmem:[%s3 + $0x10] sm:$0xff]
      %v2498 = vld [vmem:[%s3 + $0x18] sm:$0xff]
      %v2499 = vld [vmem:[%s3 + $0x20] sm:$0xff]
      %v2500 = vld [vmem:[%s3 + $0x28] sm:$0xff]
      %v2501 = vld [vmem:[%s3 + $0x30] sm:$0xff]
      %v2502 = vld [vmem:[%s3 + $0x38] sm:$0xff]
      %v2503 = vld [vmem:[%s3 + $0x40] sm:$0xff]
      %vm2504 = vcmask 588800
      %v2506 = vsel %vm2504, %v2473, 0
      %v2509 = vsel %vm2504, %v2474, 0
      %v2512 = vsel %vm2504, %v2475, 0
      %v2515 = vsel %vm2504, %v2476, 0
      %v2518 = vsel %vm2504, %v2477, 0
      %v2521 = vsel %vm2504, %v2478, 0
      %v2524 = vsel %vm2504, %v2479, 0
      %v2527 = vsel %vm2504, %v2480, 0
      %v2530 = vsel %vm2504, %v2481, 0
      %v2533 = vsel %vm2504, %v2482, 0
      %v2536 = vsel %vm2504, %v2483, 0
      %v2539 = vsel %vm2504, %v2484, 0
      %v2542 = vsel %vm2504, %v2485, 0
      %v2545 = vsel %vm2504, %v2486, 0
      %v2548 = vsel %vm2504, %v2487, 0
      %v2551 = vsel %vm2504, %v2488, 0
      %v2554 = vsel %vm2504, %v2489, 0
      %v2557 = vsel %vm2504, %v2490, 0
      %v2560 = vsel %vm2504, %v2491, 0
      %v2563 = vsel %vm2504, %v2492, 0
      %v2566 = vsel %vm2504, %v2493, 0
      %v2569 = vsel %vm2504, %v2494, 0
      %2571 = vmatprep.subr.mxu0 0.0
      %2572 = vmatpush1.msra.mxu0 %v2495
      %2573 = vmatprep.subr.mxu0 0.0
      %2574 = vmatpush1.msra.mxu0 %v2496
      %2575 = vmatprep.subr.mxu0 0.0
      %2576 = vmatpush1.msra.mxu0 %v2497
      %2577 = vmatprep.subr.mxu0 0.0
      %2578 = vmatpush1.msra.mxu0 %v2498
      %2579 = vmatprep.subr.mxu0 0.0
      %2580 = vmatpush1.msra.mxu0 %v2499
      %2581 = vmatprep.subr.mxu0 0.0
      %2582 = vmatpush1.msra.mxu0 %v2500
      %2583 = vmatprep.subr.mxu0 0.0
      %2584 = vmatpush1.msra.mxu0 %v2501
      %2585 = vmatprep.subr.mxu0 0.0
      %2586 = vmatpush1.msra.mxu0 %v2502
      %2587 = vmatprep.subr.mxu0 0.0
      %2588 = vmatpush1.msra.mxu0 %v2503
      %2589 = vmatprep.subr.mxu0 0.0
      %2590 = vmatpush1.msra.mxu0 0.0
      %2591 = vmatprep.subr.mxu0 0.0
      %2592 = vmatpush1.msra.mxu0 0.0
      %2593 = vmatprep.subr.mxu0 0.0
      %2594 = vmatpush1.msra.mxu0 0.0
      %2595 = vmatprep.subr.mxu0 0.0
      %2596 = vmatpush1.msra.mxu0 0.0
      %2597 = vmatprep.subr.mxu0 0.0
      %2598 = vmatpush1.msra.mxu0 0.0
      %2599 = vmatprep.subr.mxu0 0.0
      %2600 = vmatpush1.msra.mxu0 0.0
      %2601 = vmatprep.subr.mxu0 0.0
      %2602 = vmatpush1.msra.mxu0 0.0
      %2603 = vmatprep.subr.mxu0 0.0
      %2604 = vmatpush1.msra.mxu0 0.0
      %2605 = vmatprep.subr.mxu0 0.0
      %2606 = vmatpush1.msra.mxu0 0.0
      %2607 = vmatprep.subr.mxu0 0.0
      %2608 = vmatpush1.msra.mxu0 0.0
      %2609 = vmatprep.subr.mxu0 0.0
      %2610 = vmatpush1.msra.mxu0 0.0
      %2611 = vmatprep.subr.mxu0 0.0
      %2612 = vmatpush1.msra.mxu0 0.0
      %2613 = vmatprep.subr.mxu0 0.0
      %2614 = vmatpush1.msra.mxu0 0.0
      %2615 = vmatprep.subr.mxu0 0.0
      %2616 = vmatpush1.msra.mxu0 0.0
      %2617 = vmatprep.subr.mxu0 0.0
      %2618 = vmatpush1.msra.mxu0 0.0
      %2619 = vmatprep.subr.mxu0 0.0
      %2620 = vmatpush1.msra.mxu0 0.0
      %2621 = vmatprep.subr.mxu0 0.0
      %2622 = vmatpush1.msra.mxu0 0.0
      %2623 = vmatprep.subr.mxu0 0.0
      %2624 = vmatpush1.msra.mxu0 0.0
      %2625 = vmatprep.subr.mxu0 0.0
      %2626 = vmatpush1.msra.mxu0 0.0
      %2627 = vmatprep.subr.mxu0 0.0
      %2628 = vmatpush1.msra.mxu0 0.0
      %2629 = vmatprep.subr.mxu0 0.0
      %2630 = vmatpush1.msra.mxu0 0.0
      %2631 = vmatprep.subr.mxu0 0.0
      %2632 = vmatpush1.msra.mxu0 0.0
      %2633 = vmatprep.subr.mxu0 0.0
      %2634 = vmatpush1.msra.mxu0 0.0
      %2635 = vmatprep.mubr.f32.mxu0 0.0
      %2636 = vmatmul.mubr.f32.gmra.mrb[0].mxu0 %v2506
      %v2637 = vpop.f32.mrb[0].mxu0
      %v2638 = vadd.f32 0.0, %v2637
      %v2639 = vpop.f32.mrb[0].mxu0
      %2640 = vmatprep.mubr.f32.mxu0 0.0
      %2641 = vmatmul.mubr.f32.gmra.mrb[0].mxu0 %v2509
      %v2642 = vpop.f32.mrb[0].mxu0
      %v2643 = vadd.f32 0.0, %v2642
      %v2644 = vpop.f32.mrb[0].mxu0
      %2645 = vmatprep.mubr.f32.mxu0 0.0
      %2646 = vmatmul.mubr.f32.gmra.mrb[0].mxu0 %v2512
      %v2647 = vpop.f32.mrb[0].mxu0
      %v2648 = vadd.f32 0.0, %v2647
      %v2649 = vpop.f32.mrb[0].mxu0
      %2650 = vmatprep.mubr.f32.mxu0 0.0
      %2651 = vmatmul.mubr.f32.gmra.mrb[0].mxu0 %v2515
      %v2652 = vpop.f32.mrb[0].mxu0
      %v2653 = vadd.f32 0.0, %v2652
      %v2654 = vpop.f32.mrb[0].mxu0
      %2655 = vmatprep.mubr.f32.mxu0 0.0
      %2656 = vmatmul.mubr.f32.gmra.mrb[0].mxu0 %v2518
      %v2657 = vpop.f32.mrb[0].mxu0
      %v2658 = vadd.f32 0.0, %v2657
      %v2659 = vpop.f32.mrb[0].mxu0
      %2660 = vmatprep.mubr.f32.mxu0 0.0
      %2661 = vmatmul.mubr.f32.gmra.mrb[0].mxu0 %v2521
      %v2662 = vpop.f32.mrb[0].mxu0
      %v2663 = vadd.f32 0.0, %v2662
      %v2664 = vpop.f32.mrb[0].mxu0
      %2665 = vmatprep.mubr.f32.mxu0 0.0
      %2666 = vmatmul.mubr.f32.gmra.mrb[0].mxu0 %v2524
      %v2667 = vpop.f32.mrb[0].mxu0
      %v2668 = vadd.f32 0.0, %v2667
      %v2669 = vpop.f32.mrb[0].mxu0
      %2670 = vmatprep.mubr.f32.mxu0 0.0
      %2671 = vmatmul.mubr.f32.gmra.mrb[0].mxu0 %v2527
      %v2672 = vpop.f32.mrb[0].mxu0
      %v2673 = vadd.f32 0.0, %v2672
      %v2674 = vpop.f32.mrb[0].mxu0
      %2675 = vmatprep.mubr.f32.mxu0 0.0
      %2676 = vmatmul.mubr.f32.gmra.mrb[0].mxu0 %v2530
      %v2677 = vpop.f32.mrb[0].mxu0
      %v2678 = vadd.f32 0.0, %v2677
      %v2679 = vpop.f32.mrb[0].mxu0
      %2680 = vmatprep.mubr.f32.mxu0 0.0
      %2681 = vmatmul.mubr.f32.gmra.mrb[0].mxu0 %v2533
      %v2682 = vpop.f32.mrb[0].mxu0
      %v2683 = vadd.f32 0.0, %v2682
      %v2684 = vpop.f32.mrb[0].mxu0
      %2685 = vmatprep.mubr.f32.mxu0 0.0
      %2686 = vmatmul.mubr.f32.gmra.mrb[0].mxu0 %v2536
      %v2687 = vpop.f32.mrb[0].mxu0
      %v2688 = vadd.f32 0.0, %v2687
      %v2689 = vpop.f32.mrb[0].mxu0
      %2690 = vmatprep.mubr.f32.mxu0 0.0
      %2691 = vmatmul.mubr.f32.gmra.mrb[0].mxu0 %v2539
      %v2692 = vpop.f32.mrb[0].mxu0
      %v2693 = vadd.f32 0.0, %v2692
      %v2694 = vpop.f32.mrb[0].mxu0
      %2695 = vmatprep.mubr.f32.mxu0 0.0
      %2696 = vmatmul.mubr.f32.gmra.mrb[0].mxu0 %v2542
      %v2697 = vpop.f32.mrb[0].mxu0
      %v2698 = vadd.f32 0.0, %v2697
      %v2699 = vpop.f32.mrb[0].mxu0
      %2700 = vmatprep.mubr.f32.mxu0 0.0
      %2701 = vmatmul.mubr.f32.gmra.mrb[0].mxu0 %v2545
      %v2702 = vpop.f32.mrb[0].mxu0
      %v2703 = vadd.f32 0.0, %v2702
      %v2704 = vpop.f32.mrb[0].mxu0
      %2705 = vmatprep.mubr.f32.mxu0 0.0
      %2706 = vmatmul.mubr.f32.gmra.mrb[0].mxu0 %v2548
      %v2707 = vpop.f32.mrb[0].mxu0
      %v2708 = vadd.f32 0.0, %v2707
      %v2709 = vpop.f32.mrb[0].mxu0
      %2710 = vmatprep.mubr.f32.mxu0 0.0
      %2711 = vmatmul.mubr.f32.gmra.mrb[0].mxu0 %v2551
      %v2712 = vpop.f32.mrb[0].mxu0
      %v2713 = vadd.f32 0.0, %v2712
      %v2714 = vpop.f32.mrb[0].mxu0
      %2715 = vmatprep.mubr.f32.mxu0 0.0
      %2716 = vmatmul.mubr.f32.gmra.mrb[0].mxu0 %v2554
      %v2717 = vpop.f32.mrb[0].mxu0
      %v2718 = vadd.f32 0.0, %v2717
      %v2719 = vpop.f32.mrb[0].mxu0
      %2720 = vmatprep.mubr.f32.mxu0 0.0
      %2721 = vmatmul.mubr.f32.gmra.mrb[0].mxu0 %v2557
      %v2722 = vpop.f32.mrb[0].mxu0
      %v2723 = vadd.f32 0.0, %v2722
      %v2724 = vpop.f32.mrb[0].mxu0
      %2725 = vmatprep.mubr.f32.mxu0 0.0
      %2726 = vmatmul.mubr.f32.gmra.mrb[0].mxu0 %v2560
      %v2727 = vpop.f32.mrb[0].mxu0
      %v2728 = vadd.f32 0.0, %v2727
      %v2729 = vpop.f32.mrb[0].mxu0
      %2730 = vmatprep.mubr.f32.mxu0 0.0
      %2731 = vmatmul.mubr.f32.gmra.mrb[0].mxu0 %v2563
      %v2732 = vpop.f32.mrb[0].mxu0
      %v2733 = vadd.f32 0.0, %v2732
      %v2734 = vpop.f32.mrb[0].mxu0
      %2735 = vmatprep.mubr.f32.mxu0 0.0
      %2736 = vmatmul.mubr.f32.gmra.mrb[0].mxu0 %v2566
      %v2737 = vpop.f32.mrb[0].mxu0
      %v2738 = vadd.f32 0.0, %v2737
      %v2739 = vpop.f32.mrb[0].mxu0
      %2740 = vmatprep.mubr.f32.mxu0 0.0
      %2741 = vmatmul.mubr.f32.gmra.mrb[0].mxu0 %v2569
      %v2742 = vpop.f32.mrb[0].mxu0
      %v2743 = vadd.f32 0.0, %v2742
      %v2744 = vpop.f32.mrb[0].mxu0
      %2745 = vdwg.mxu0
      %v2747 = vlaneseq
      %v2748 = vshrl.u32 %v2747, 7
      %v2749 = vsub.s32 0, %v2748
      %v2750 = vrot.slane %v1643, %v2749
      %v2753 = vsel %vm2426, %v1645, 0
      %v2756 = vsel %vm2426, %v1647, 0
      %v2759 = vsel %vm2426, %v1649, 0
      %v2762 = vsel %vm2426, %v1651, 0
      %v2765 = vsel %vm2426, %v1653, 0
      %2767 = vmatprep.subr.mxu0 0.0
      %2768 = vmatpush1.msra.mxu0 %v2638
      %2769 = vmatprep.subr.mxu0 0.0
      %2770 = vmatpush1.msra.mxu0 %v2643
      %2771 = vmatprep.subr.mxu0 0.0
      %2772 = vmatpush1.msra.mxu0 %v2648
      %2773 = vmatprep.subr.mxu0 0.0
      %2774 = vmatpush1.msra.mxu0 %v2653
      %2775 = vmatprep.subr.mxu0 0.0
      %2776 = vmatpush1.msra.mxu0 %v2658
      %2777 = vmatprep.subr.mxu0 0.0
      %2778 = vmatpush1.msra.mxu0 %v2663
      %2779 = vmatprep.subr.mxu0 0.0
      %2780 = vmatpush1.msra.mxu0 %v2668
      %2781 = vmatprep.subr.mxu0 0.0
      %2782 = vmatpush1.msra.mxu0 %v2673
      %2783 = vmatprep.subr.mxu0 0.0
      %2784 = vmatpush1.msra.mxu0 %v2678
      %2785 = vmatprep.subr.mxu0 0.0
      %2786 = vmatpush1.msra.mxu0 %v2683
      %2787 = vmatprep.subr.mxu0 0.0
      %2788 = vmatpush1.msra.mxu0 %v2688
      %2789 = vmatprep.subr.mxu0 0.0
      %2790 = vmatpush1.msra.mxu0 %v2693
      %2791 = vmatprep.subr.mxu0 0.0
      %2792 = vmatpush1.msra.mxu0 %v2698
      %2793 = vmatprep.subr.mxu0 0.0
      %2794 = vmatpush1.msra.mxu0 %v2703
      %2795 = vmatprep.subr.mxu0 0.0
      %2796 = vmatpush1.msra.mxu0 %v2708
      %2797 = vmatprep.subr.mxu0 0.0
      %2798 = vmatpush1.msra.mxu0 %v2713
      %2799 = vmatprep.subr.mxu0 0.0
      %2800 = vmatpush1.msra.mxu0 %v2718
      %2801 = vmatprep.subr.mxu0 0.0
      %2802 = vmatpush1.msra.mxu0 %v2723
      %2803 = vmatprep.subr.mxu0 0.0
      %2804 = vmatpush1.msra.mxu0 %v2728
      %2805 = vmatprep.subr.mxu0 0.0
      %2806 = vmatpush1.msra.mxu0 %v2733
      %2807 = vmatprep.subr.mxu0 0.0
      %2808 = vmatpush1.msra.mxu0 %v2738
      %2809 = vmatprep.subr.mxu0 0.0
      %2810 = vmatpush1.msra.mxu0 %v2743
      %2811 = vmatprep.subr.mxu0 0.0
      %2812 = vmatpush1.msra.mxu0 0.0
      %2813 = vmatprep.subr.mxu0 0.0
      %2814 = vmatpush1.msra.mxu0 0.0
      %2815 = vmatprep.subr.mxu0 0.0
      %2816 = vmatpush1.msra.mxu0 0.0
      %2817 = vmatprep.subr.mxu0 0.0
      %2818 = vmatpush1.msra.mxu0 0.0
      %2819 = vmatprep.subr.mxu0 0.0
      %2820 = vmatpush1.msra.mxu0 0.0
      %2821 = vmatprep.subr.mxu0 0.0
      %2822 = vmatpush1.msra.mxu0 0.0
      %2823 = vmatprep.subr.mxu0 0.0
      %2824 = vmatpush1.msra.mxu0 0.0
      %2825 = vmatprep.subr.mxu0 0.0
      %2826 = vmatpush1.msra.mxu0 0.0
      %2827 = vmatprep.subr.mxu0 0.0
      %2828 = vmatpush1.msra.mxu0 0.0
      %2829 = vmatprep.subr.mxu0 0.0
      %2830 = vmatpush1.msra.mxu0 0.0
      %2831 = vmatprep.mubr.f32.mxu0 %v2753
      %2832 = vmatmul.mubr.f32.gmra.mrb[0].mxu0 %v1644
      %v2833 = vpop.f32.mrb[0].mxu0
      %v2834 = vadd.f32 %v2750, %v2833
      %v2835 = vpop.f32.mrb[0].mxu0
      %2836 = vmatprep.mubr.f32.mxu0 %v2756
      %2837 = vmatmul.mubr.f32.gmra.mrb[0].mxu0 %v1646
      %v2838 = vpop.f32.mrb[0].mxu0
      %v2839 = vadd.f32 %v2750, %v2838
      %v2840 = vpop.f32.mrb[0].mxu0
      %2841 = vmatprep.mubr.f32.mxu0 %v2759
      %2842 = vmatmul.mubr.f32.gmra.mrb[0].mxu0 %v1648
      %v2843 = vpop.f32.mrb[0].mxu0
      %v2844 = vadd.f32 %v2750, %v2843
      %v2845 = vpop.f32.mrb[0].mxu0
      %2846 = vmatprep.mubr.f32.mxu0 %v2762
      %2847 = vmatmul.mubr.f32.gmra.mrb[0].mxu0 %v1650
      %v2848 = vpop.f32.mrb[0].mxu0
      %v2849 = vadd.f32 %v2750, %v2848
      %v2850 = vpop.f32.mrb[0].mxu0
      %2851 = vmatprep.mubr.f32.mxu0 %v2765
      %2852 = vmatmul.mubr.f32.gmra.mrb[0].mxu0 %v1652
      %v2853 = vpop.f32.mrb[0].mxu0
      %v2854 = vadd.f32 %v2750, %v2853
      %v2855 = vpop.f32.mrb[0].mxu0
      %2856 = vdwg.mxu0
      %v2857 = vmax.f32 %v2834, 0.0
      %v2858 = vmax.f32 %v2839, 0.0
      %v2859 = vmax.f32 %v2844, 0.0
      %v2860 = vmax.f32 %v2849, 0.0
      %v2861 = vmax.f32 %v2854, 0.0
      %2862 = vst [vmem:[%s253] sm:$0xff] %v2857
      %2863 = vst [vmem:[%s253 + $0x8] sm:$0xff] %v2858
      %2864 = vst [vmem:[%s253 + $0x10] sm:$0xff] %v2859
      %2865 = vst [vmem:[%s253 + $0x18] sm:$0xff] %v2860
      %2866 = vst [vmem:[%s253 + $0x20] sm:$0xff] %v2861
      %p2867 = scmp.lt.s32.totalorder %s17, 1
      %s2868 = scalar_select %p2867, %s17, 1
      %s2869 = smul.addr %s2868, 5
      %s2870 = smul.addr %s2869, 8
      %s2871 = scalar_lea.vmem %s6, %s2870
      // Predicated region
      $region45: #{_lambda_.1} parent=43 // pred_check
        %p2872 = pneg %p166
      $region46: #{_lambda_.1} parent=43 // pred_check_branch
        %2874 = sbr.rel (%p2872) target = $region48
      $region47: #{_lambda_.1} parent=43 // pred_region
        _
      $region48: #{_lambda_.1} parent=43 // pred_fallthru
        _
    $region44: #{_lambda_.1} parent=5 // pred_fallthru
      _
    %p2875 = scmp.le.s32.totalorder 2, %s12
    // Predicated region
    $region49: #{_lambda_.1} parent=5 // pred_check
      %p2876 = pneg %p2875
    $region50: #{_lambda_.1} parent=5 // pred_check_branch
      %2878 = sbr.rel (%p2876) target = $region52
    $region51: #{_lambda_.1} parent=5 // pred_region
      %s2879 = ssub.s32 %s12, 2
      // Predicated region
      $region53: #{_lambda_.1} parent=51 // pred_check
        %p2880 = pneg %p172
      $region54: #{_lambda_.1} parent=51 // pred_check_branch
        %2882 = sbr.rel (%p2880) target = $region56
      $region55: #{_lambda_.1} parent=51 // pred_region
        %p2883 = scmp.lt.s32.totalorder %s18, 1
        %s2884 = scalar_select %p2883, %s18, 1
        %s2885 = smul.addr %s2884, 5
        %s2886 = smul.addr %s2885, 8
        %s2887 = scalar_lea.vmem %s6, %s2886
      $region56: #{_lambda_.1} parent=51 // pred_fallthru
        _
    $region52: #{_lambda_.1} parent=5 // pred_fallthru
      _
  $region6: #{_lambda_.1} parent=0 // loop_footer
    %s16 = sadd.s32 1, %s12
  $region7: #{_lambda_.1} parent=0 // loop_footer_branch
    %11 = sbr.rel target = $region3
  $region8: #{_lambda_.1} parent=0 // loop_exit
    _

</llo_original>
